<compile_context>
chip_gen: v7x
topology: tpu7x:2x2x1
jax: 0.10.0
libtpu: 0.0.40
codegen_flags: <defaults>
</compile_context>

<pallas_src>
import jax
import jax.numpy as jnp
from jax.experimental import pallas as pl
from jax.experimental.pallas import tpu as pltpu

NUM_CLASSES = 10
IMG_FEATS = 784  # 1 * 28 * 28
H1, H2 = 512, 256


def _discriminator_kernel(img_ref, lbl_ref,
                          w1i_ref, t_ref,
                          w2_ref, b2_ref,
                          w3_ref, b3_ref,
                          o_ref):
    # img_ref : (TB, 784) f32/bf16   lbl_ref : (TB, 1) i32
    # w1i_ref : (784, 512) bf16      t_ref   : (10, 512) bf16  (= emb @ W1_emb + b1)
    # w2_ref  : (512, 256) bf16      b2_ref  : (1, 256) f32
    # w3_ref  : (1, 256)   f32       b3_ref  : (1, 1)   f32
    # o_ref   : (TB, 1)    f32
    img = img_ref[...].astype(jnp.bfloat16)                   # in-kernel VPU cast
    lbl = lbl_ref[...]                                        # (TB, 1) int32

    # Embedding lookup as one-hot matmul against the folded table T.
    tb = img.shape[0]
    cls_iota = jax.lax.broadcasted_iota(jnp.int32, (tb, NUM_CLASSES), 1)
    onehot = (cls_iota == lbl).astype(t_ref.dtype)            # (TB, 10) bf16

    # Layer 1:  cat([img, emb(label)]) @ W1 + b1
    #        == img @ W1_img + onehot @ (emb @ W1_emb + b1)
    h1 = (jnp.dot(img, w1i_ref[...], preferred_element_type=jnp.float32)
          + jnp.dot(onehot, t_ref[...], preferred_element_type=jnp.float32))
    h1 = jnp.maximum(h1, 0.2 * h1)                            # LeakyReLU(0.2)

    # Layer 2
    h2 = jnp.dot(h1.astype(w2_ref.dtype), w2_ref[...],
                 preferred_element_type=jnp.float32) + b2_ref[...]
    h2 = jnp.maximum(h2, 0.2 * h2)                            # LeakyReLU(0.2)

    # Layer 3 (output width 1): VPU multiply + lane reduce, skip the MXU.
    h3 = jnp.sum(h2 * w3_ref[...], axis=-1, keepdims=True) + b3_ref[...]
    o_ref[...] = jax.nn.sigmoid(h3).astype(o_ref.dtype)


def _pick_batch_tile(batch, tb_max):
    """Pick the batch tile.

    - batch <= 16: single full-batch block (full-dim block sidesteps the (8,128)
      alignment constraint, and splitting a tiny batch across cores is useless).
    - otherwise: aim for >= 2 grid steps (so the 'parallel' batch axis spans
      both v7x TensorCores and DMA/compute pipelining kicks in), 128-aligned
      when large enough (8-aligned otherwise), capped at tb_max.
    """
    if batch <= 16:
        return batch
    half = pl.cdiv(batch, 2)
    align = 128 if (half >= 128 and tb_max >= 128) else 8
    tb = min(tb_max, pl.cdiv(half, align) * align)
    return max(align, (tb // align) * align)


def discriminator_forward(img, labels, kparams, *, tb=1024):
    """img: (B, 1, 28, 28) f32 or bf16 NCHW; labels: (B,) int.  Returns (B, 1) f32."""
    B = img.shape[0]
    # view(B, -1): metadata-only reshape of a contiguous array.  NO dtype cast
    # here — the bf16 cast happens on the VPU inside the kernel (saves an
    # entire HBM read+write pass over the image).
    img_flat = img.reshape(B, -1)
    lbl2d = labels.astype(jnp.int32).reshape(B, 1)

    tb = _pick_batch_tile(B, tb)
    grid = (pl.cdiv(B, tb),)

    w1i = kparams["w1_img"]
    t = kparams["t"]
    w2 = kparams["w2"]
    b2 = kparams["b2"]
    w3r = kparams["w3_row"]
    b3 = kparams["b3"]

    def resident(arr):
        # Weight/bias blocks: full array, same block every grid step -> fetched
        # once and kept in VMEM across the whole grid.
        return pl.BlockSpec(arr.shape, lambda i: (0, 0))

    cost = pl.CostEstimate(
        flops=2 * B * (IMG_FEATS * H1 + NUM_CLASSES * H1 + H1 * H2 + H2),
        transcendentals=B,
        bytes_accessed=(img_flat.size * img_flat.dtype.itemsize
                        + lbl2d.size * 4
                        + sum(a.size * a.dtype.itemsize
                              for a in (w1i, t, w2, b2, w3r, b3))
                        + B * 4))

    return pl.pallas_call(
        _discriminator_kernel,
        out_shape=jax.ShapeDtypeStruct((B, 1), jnp.float32),
        grid=grid,
        in_specs=[
            pl.BlockSpec((tb, IMG_FEATS), lambda i: (i, 0)),   # img tile (streamed)
            pl.BlockSpec((tb, 1), lambda i: (i, 0)),           # labels tile (streamed)
            resident(w1i),
            resident(t),
            resident(w2),
            resident(b2),
            resident(w3r),
            resident(b3),
        ],
        out_specs=pl.BlockSpec((tb, 1), lambda i: (i, 0)),
        compiler_params=pltpu.CompilerParams(
            dimension_semantics=("parallel",),                 # shard batch over TCs
            vmem_limit_bytes=32 * 1024 * 1024),                # actual need < 10 MiB
        cost_estimate=cost,
    )(img_flat, lbl2d, w1i, t, w2, b2, w3r, b3)


def init_params(key):
    """PyTorch-default-style init (uniform ±1/sqrt(fan_in), N(0,1) embedding),
    in the original layout / f32."""
    ks = jax.random.split(key, 7)

    def lin(kw, kb, fan_in, fan_out):
        bound = 1.0 / jnp.sqrt(fan_in)
        w = jax.random.uniform(kw, (fan_in, fan_out), jnp.float32, -bound, bound)
        b = jax.random.uniform(kb, (1, fan_out), jnp.float32, -bound, bound)
        return w, b

    emb = jax.random.normal(ks[0], (NUM_CLASSES, NUM_CLASSES), jnp.float32)
    w1, b1 = lin(ks[1], ks[2], IMG_FEATS + NUM_CLASSES, H1)    # (794, 512)
    w2, b2 = lin(ks[3], ks[4], H1, H2)
    w3, b3 = lin(ks[5], ks[6], H2, 1)
    return {
        "emb": emb,
        "w1_img": w1[:IMG_FEATS],        # (784, 512)
        "w1_emb": w1[IMG_FEATS:],        # (10, 512)
        "b1": b1,                        # (1, 512)
        "w2": w2, "b2": b2,              # (512, 256), (1, 256)
        "w3": w3, "b3": b3,              # (256, 1),   (1, 1)
    }


def prepare_params(raw):
    """Pack original-layout params into kernel-ready arrays:
    fold emb @ W1_emb + b1 into one (10, 512) table, cast big mats to bf16."""
    t = (raw["emb"].astype(jnp.float32) @ raw["w1_emb"].astype(jnp.float32)
         + raw["b1"].astype(jnp.float32))                      # (10, 512)
    return {
        "w1_img": raw["w1_img"].astype(jnp.bfloat16),          # (784, 512)
        "t": t.astype(jnp.bfloat16),                           # (10, 512)
        "w2": raw["w2"].astype(jnp.bfloat16),                  # (512, 256)
        "b2": raw["b2"].astype(jnp.float32),                   # (1, 256)
        "w3_row": raw["w3"].T.astype(jnp.float32),             # (1, 256)
        "b3": raw["b3"].astype(jnp.float32),                   # (1, 1)
    }


def _reference_forward(img, labels, params):
    """Pure-JAX f32 reference matching the PyTorch module exactly."""
    B = img.shape[0]
    img_flat = img.reshape(B, -1).astype(jnp.float32)
    emb = params["emb"][labels]                                # (B, 10)
    w1 = jnp.concatenate([params["w1_img"], params["w1_emb"]], axis=0)
    d_in = jnp.concatenate([img_flat, emb], axis=-1)
    h1 = d_in @ w1 + params["b1"]
    h1 = jnp.where(h1 > 0, h1, 0.2 * h1)
    h2 = h1 @ params["w2"] + params["b2"]
    h2 = jnp.where(h2 > 0, h2, 0.2 * h2)
    h3 = h2 @ params["w3"] + params["b3"]
    return jax.nn.sigmoid(h3)


if __name__ == "__main__":
    key = jax.random.PRNGKey(0)
    k_data, k_par = jax.random.split(key)
    params = init_params(k_par)
    kparams = prepare_params(params)

    # B=20  -> tb=16, 2 grid steps + partial last tile (small-batch path)
    # B=300 -> tb=256, 2 grid steps + partial last tile (128-aligned path)
    for B in (20, 300):
        k_img, k_lbl = jax.random.split(jax.random.fold_in(k_data, B))
        img = jax.random.normal(k_img, (B, 1, 28, 28), jnp.float32)       # NCHW
        labels = jax.random.randint(k_lbl, (B,), 0, NUM_CLASSES, jnp.int32)

        out = jax.block_until_ready(discriminator_forward(img, labels, kparams))
        ref = _reference_forward(img, labels, params)
        assert out.shape == (B, 1)
        # bf16 weights/img with f32 accumulation -> loose tolerance vs f32 reference.
        assert jnp.allclose(out.astype(jnp.float32), ref, atol=3e-2, rtol=3e-2), (
            B, out, ref)

    print("KERNEL_OK")
</pallas_src>

<mosaic_0001>
module attributes {stable_mosaic.version = 11 : i64} {
  func.func @_discriminator_kernel(%arg0: i32, %arg1: memref<16x784xf32, #tpu.memory_space<vmem>>, %arg2: memref<16x1xi32, #tpu.memory_space<vmem>>, %arg3: memref<784x512xbf16, #tpu.memory_space<vmem>>, %arg4: memref<10x512xbf16, #tpu.memory_space<vmem>>, %arg5: memref<512x256xbf16, #tpu.memory_space<vmem>>, %arg6: memref<1x256xf32, #tpu.memory_space<vmem>>, %arg7: memref<1x256xf32, #tpu.memory_space<vmem>>, %arg8: memref<1x1xf32, #tpu.memory_space<vmem>>, %arg9: memref<16x1xf32, #tpu.memory_space<vmem>>) attributes {dimension_semantics = [#tpu.dimension_semantics<parallel>], iteration_bounds = array<i64: 2>, scalar_prefetch = 0 : i64, scratch_operands = 0 : i64, tpu.core_type = #tpu.core_type<tc>, window_params = [{transform_indices = @transform_0, window_bounds = array<i64: 16, 784>}, {transform_indices = @transform_1, window_bounds = array<i64: 16, 1>}, {pipeline_mode = #tpu.pipeline_mode<synchronous>, transform_indices = @transform_2, window_bounds = array<i64: 784, 512>}, {pipeline_mode = #tpu.pipeline_mode<synchronous>, transform_indices = @transform_3, window_bounds = array<i64: 10, 512>}, {pipeline_mode = #tpu.pipeline_mode<synchronous>, transform_indices = @transform_4, window_bounds = array<i64: 512, 256>}, {pipeline_mode = #tpu.pipeline_mode<synchronous>, transform_indices = @transform_5, window_bounds = array<i64: 1, 256>}, {pipeline_mode = #tpu.pipeline_mode<synchronous>, transform_indices = @transform_6, window_bounds = array<i64: 1, 256>}, {pipeline_mode = #tpu.pipeline_mode<synchronous>, transform_indices = @transform_7, window_bounds = array<i64: 1, 1>}, {transform_indices = @transform_8, window_bounds = array<i64: 16, 1>}]} {
    %c0 = arith.constant 0 : index
    %c0_0 = arith.constant 0 : index
    %0 = vector.load %arg1[%c0, %c0_0] : memref<16x784xf32, #tpu.memory_space<vmem>>, vector<16x784xf32>
    %1 = arith.truncf %0 : vector<16x784xf32> to vector<16x784xbf16>
    %c0_1 = arith.constant 0 : index
    %c0_2 = arith.constant 0 : index
    %2 = vector.load %arg2[%c0_1, %c0_2] : memref<16x1xi32, #tpu.memory_space<vmem>>, vector<16x1xi32>
    %3 = tpu.iota {dimensions = array<i32: 1>} : vector<16x10xi32>
    %4 = vector.broadcast %2 : vector<16x1xi32> to vector<16x10xi32>
    %5 = arith.cmpi eq, %3, %4 : vector<16x10xi32>
    %6 = arith.extui %5 : vector<16x10xi1> to vector<16x10xi32>
    %7 = arith.sitofp %6 : vector<16x10xi32> to vector<16x10xf32>
    %8 = arith.truncf %7 : vector<16x10xf32> to vector<16x10xbf16>
    %c0_3 = arith.constant 0 : index
    %c0_4 = arith.constant 0 : index
    %9 = vector.load %arg3[%c0_3, %c0_4] : memref<784x512xbf16, #tpu.memory_space<vmem>>, vector<784x512xbf16>
    %cst = arith.constant dense<0.000000e+00> : vector<16x512xf32>
    %10 = tpu.matmul %1, %9, %cst {dimension_numbers = #tpu.dot_dimension_numbers<[1], [0], [0], [1], [0, 0, 1, 1], [], []>} : vector<16x784xbf16>, vector<784x512xbf16>, vector<16x512xf32> -> vector<16x512xf32>
    %c0_5 = arith.constant 0 : index
    %c0_6 = arith.constant 0 : index
    %11 = vector.load %arg4[%c0_5, %c0_6] : memref<10x512xbf16, #tpu.memory_space<vmem>>, vector<10x512xbf16>
    %cst_7 = arith.constant dense<0.000000e+00> : vector<16x512xf32>
    %12 = tpu.matmul %8, %11, %cst_7 {dimension_numbers = #tpu.dot_dimension_numbers<[1], [0], [0], [1], [0, 0, 1, 1], [], []>} : vector<16x10xbf16>, vector<10x512xbf16>, vector<16x512xf32> -> vector<16x512xf32>
    %13 = arith.addf %10, %12 : vector<16x512xf32>
    %cst_8 = arith.constant 2.000000e-01 : f32
    %14 = vector.broadcast %cst_8 : f32 to vector<16x512xf32>
    %15 = arith.mulf %14, %13 : vector<16x512xf32>
    %16 = arith.maximumf %13, %15 : vector<16x512xf32>
    %17 = arith.truncf %16 : vector<16x512xf32> to vector<16x512xbf16>
    %c0_9 = arith.constant 0 : index
    %c0_10 = arith.constant 0 : index
    %18 = vector.load %arg5[%c0_9, %c0_10] : memref<512x256xbf16, #tpu.memory_space<vmem>>, vector<512x256xbf16>
    %cst_11 = arith.constant dense<0.000000e+00> : vector<16x256xf32>
    %19 = tpu.matmul %17, %18, %cst_11 {dimension_numbers = #tpu.dot_dimension_numbers<[1], [0], [0], [1], [0, 0, 1, 1], [], []>} : vector<16x512xbf16>, vector<512x256xbf16>, vector<16x256xf32> -> vector<16x256xf32>
    %c0_12 = arith.constant 0 : index
    %c0_13 = arith.constant 0 : index
    %20 = vector.load %arg6[%c0_12, %c0_13] : memref<1x256xf32, #tpu.memory_space<vmem>>, vector<1x256xf32>
    %21 = vector.broadcast %20 : vector<1x256xf32> to vector<16x256xf32>
    %22 = arith.addf %19, %21 : vector<16x256xf32>
    %cst_14 = arith.constant 2.000000e-01 : f32
    %23 = vector.broadcast %cst_14 : f32 to vector<16x256xf32>
    %24 = arith.mulf %23, %22 : vector<16x256xf32>
    %25 = arith.maximumf %22, %24 : vector<16x256xf32>
    %c0_15 = arith.constant 0 : index
    %c0_16 = arith.constant 0 : index
    %26 = vector.load %arg7[%c0_15, %c0_16] : memref<1x256xf32, #tpu.memory_space<vmem>>, vector<1x256xf32>
    %27 = vector.broadcast %26 : vector<1x256xf32> to vector<16x256xf32>
    %28 = arith.mulf %25, %27 : vector<16x256xf32>
    %cst_17 = arith.constant dense<0.000000e+00> : vector<16xf32>
    %29 = vector.multi_reduction <add>, %28, %cst_17 [1] : vector<16x256xf32> to vector<16xf32>
    %30 = vector.shape_cast %29 : vector<16xf32> to vector<16x1xf32>
    %c0_18 = arith.constant 0 : index
    %c0_19 = arith.constant 0 : index
    %31 = vector.load %arg8[%c0_18, %c0_19] : memref<1x1xf32, #tpu.memory_space<vmem>>, vector<1x1xf32>
    %32 = vector.broadcast %31 : vector<1x1xf32> to vector<16x1xf32>
    %33 = arith.addf %30, %32 : vector<16x1xf32>
    %34 = arith.negf %33 : vector<16x1xf32>
    %35 = math.exp %34 : vector<16x1xf32>
    %cst_20 = arith.constant 1.000000e+00 : f32
    %36 = vector.broadcast %cst_20 : f32 to vector<16x1xf32>
    %37 = arith.addf %36, %35 : vector<16x1xf32>
    %38 = arith.divf %36, %37 : vector<16x1xf32>
    %c0_21 = arith.constant 0 : index
    %c0_22 = arith.constant 0 : index
    %39 = vector.load %arg9[%c0_21, %c0_22] : memref<16x1xf32, #tpu.memory_space<vmem>>, vector<16x1xf32>
    tpu.vector_store %arg9[%c0_21, %c0_22], %38 {strides = array<i32>} : memref<16x1xf32, #tpu.memory_space<vmem>>, vector<16x1xf32>,
    return
  }
  func.func @transform_0(%arg0: i32) -> (i32, i32) {
    %c0_i32 = arith.constant 0 : i32
    %c0_i32_0 = arith.constant 0 : i32
    return %arg0, %c0_i32 : i32, i32
  }
  func.func @transform_1(%arg0: i32) -> (i32, i32) {
    %c0_i32 = arith.constant 0 : i32
    %c0_i32_0 = arith.constant 0 : i32
    return %arg0, %c0_i32 : i32, i32
  }
  func.func @transform_2(%arg0: i32) -> (i32, i32) {
    %c0_i32 = arith.constant 0 : i32
    %c0_i32_0 = arith.constant 0 : i32
    %c0_i32_1 = arith.constant 0 : i32
    return %c0_i32, %c0_i32_0 : i32, i32
  }
  func.func @transform_3(%arg0: i32) -> (i32, i32) {
    %c0_i32 = arith.constant 0 : i32
    %c0_i32_0 = arith.constant 0 : i32
    %c0_i32_1 = arith.constant 0 : i32
    return %c0_i32, %c0_i32_0 : i32, i32
  }
  func.func @transform_4(%arg0: i32) -> (i32, i32) {
    %c0_i32 = arith.constant 0 : i32
    %c0_i32_0 = arith.constant 0 : i32
    %c0_i32_1 = arith.constant 0 : i32
    return %c0_i32, %c0_i32_0 : i32, i32
  }
  func.func @transform_5(%arg0: i32) -> (i32, i32) {
    %c0_i32 = arith.constant 0 : i32
    %c0_i32_0 = arith.constant 0 : i32
    %c0_i32_1 = arith.constant 0 : i32
    return %c0_i32, %c0_i32_0 : i32, i32
  }
  func.func @transform_6(%arg0: i32) -> (i32, i32) {
    %c0_i32 = arith.constant 0 : i32
    %c0_i32_0 = arith.constant 0 : i32
    %c0_i32_1 = arith.constant 0 : i32
    return %c0_i32, %c0_i32_0 : i32, i32
  }
  func.func @transform_7(%arg0: i32) -> (i32, i32) {
    %c0_i32 = arith.constant 0 : i32
    %c0_i32_0 = arith.constant 0 : i32
    %c0_i32_1 = arith.constant 0 : i32
    return %c0_i32, %c0_i32_0 : i32, i32
  }
  func.func @transform_8(%arg0: i32) -> (i32, i32) {
    %c0_i32 = arith.constant 0 : i32
    %c0_i32_0 = arith.constant 0 : i32
    return %arg0, %c0_i32 : i32, i32
  }
}

</mosaic_0001>

<llo_original>
// kernel: tpu_custom_call.1
$region0: #{tpu_custom_call.1}
  #allocation0 [shape = 'u32[]', space=smem, size = 0x4, offset = 0x4, fixed_abs, tag = 'smem constant byte address 0x4 - core index']
  #allocation1 [shape = 'u32[144,128]{1,0:T(1,128)}', space=vmem, size = 0x12000, scoped, tag = 'internal scratch']
  #allocation2 [shape = 'f32[1,1]{1,0:T(1,128)S(1)}', space=vmem, size = 0x200, scoped, tag = 'scoped memory for tpu_custom_call.1']
  %s0 = inlined_call_operand.hbm [shape: f32[20,784], index: 0, kind: input, shape index: {}]
  %s1 = inlined_call_operand.vmem [shape: s32[20,1], index: 1, kind: input, shape index: {}]
  %s2 = inlined_call_operand.hbm [shape: bf16[784,512], index: 2, kind: input, shape index: {}]
  %s3 = inlined_call_operand.vmem [shape: bf16[10,512], index: 3, kind: input, shape index: {}]
  %s4 = inlined_call_operand.hbm [shape: bf16[512,256], index: 4, kind: input, shape index: {}]
  %s5 = inlined_call_operand.vmem [shape: f32[1,256], index: 5, kind: input, shape index: {}]
  %s6 = inlined_call_operand.vmem [shape: f32[1,256], index: 6, kind: input, shape index: {}]
  %s7 = inlined_call_operand.<no memory space> [shape: f32[1,1], index: 7, kind: input, shape index: {}]
  %s8 = inlined_call_operand.vmem [shape: f32[20,1], index: 8, kind: output, shape index: {}]
  %s9 = sld [smem:[#allocation0]]
  $region125: #{tpu_custom_call.1} parent=0
    _
  %s11 = ssub.s32 1, %s9
  %s12 = scalar_select 0, %s11, %s9
  %v13 = vstv %s7
  %14 = vst [vmem:[#allocation2] sm:$0x1] %v13
  $region1: #{tpu_custom_call.1} parent=0
    #allocation3 [shape = 'u8[114688]{0}', space=vmem, size = 0x1c000, scoped, tag = 'input window, operand 0']
    #allocation4 [shape = 's32[2]{0}', space=sflag, size = 0x8, scoped, tag = 'scoped memory for tpu_custom_call.1']
    #allocation5 [shape = 'u8[802816]{0}', space=vmem, size = 0xc4000, scoped, tag = 'input window, operand 2, single buffered']
    #allocation6 [shape = 's32[1]{0}', space=sflag, size = 0x4, scoped, tag = 'scoped memory for tpu_custom_call.1']
    #allocation7 [shape = 'u8[262144]{0}', space=vmem, size = 0x40000, scoped, tag = 'input window, operand 4, single buffered']
    #allocation8 [shape = 'u8[16384]{0}', space=vmem, size = 0x4000, scoped, tag = 'output window, operand 0']
    %15 = vsyncpa [#allocation4], 0
    %s16 = scalar_lea.sflag [#allocation4], 1
    %17 = vsyncpa %s16, 0
    %18 = vsyncpa [#allocation6], 0
    loop: start=0, step=1, limit=4
    $region2: #{tpu_custom_call.1} parent=1 // loop_pre_header
      _
    $region3: #{tpu_custom_call.1} parent=1 // loop_header
      %s20 = sphi 0, %s24
      %p21 = scmp.ge.s32.totalorder %s20, 4
      %s30 = sphi 0, %s32
      %s33 = sphi 0, %s30
      %s34 = sphi 0, %s33
      %s50 = sphi 0, %s34
      %s56 = sphi 0, %s58
      %s59 = sphi 0, %s56
      %s60 = sphi 0, %s59
      %s76 = sphi 0, %s60
      %s80 = sphi 0, %s80
      %s82 = sphi 0, %s80
      %s83 = sphi 0, %s82
      %s97 = sphi 0, %s83
      %s101 = sphi 0, %s101
      %s103 = sphi 0, %s101
      %s104 = sphi 0, %s103
      %s118 = sphi 0, %s104
      %s122 = sphi 0, %s122
      %s124 = sphi 0, %s122
      %s125 = sphi 0, %s124
      %s139 = sphi 0, %s125
      %s143 = sphi 0, %s143
      %s145 = sphi 0, %s143
      %s146 = sphi 0, %s145
      %s160 = sphi 0, %s146
      %s164 = sphi 0, %s164
      %s166 = sphi 0, %s164
      %s167 = sphi 0, %s166
      %s181 = sphi 0, %s167
      %s185 = sphi 0, %s185
      %s187 = sphi 0, %s185
      %s188 = sphi 0, %s187
      %s202 = sphi 0, %s188
      %s208 = sphi 0, %s210
      %s211 = sphi 0, %s208
      %s212 = sphi 0, %s211
      %s228 = sphi 0, %s212
    $region4: #{tpu_custom_call.1} parent=1 // loop_header_branch
      %23 = sbr.rel (%p21) target = $region8
    $region5: #{tpu_custom_call.1} parent=1 // loop_body
      %s25 = ssub.s32 %s20, 1
      %s26 = ssub.s32 %s20, 2
      %s27 = sadd.s32 %s20, 1
      %s28 = ssub.s32 %s20, %s27
      %p29 = scmp.eq.s32.totalorder %s28, 0
      %s31 = sadd.s32 %s30, 1
      %s32 = scalar_select %p29, %s30, %s31
      %p35 = pneg %p29
      %p36 = scmp.eq.s32.totalorder %s20, 1
      %p37 = por %p35, %p36
      %p38 = scmp.ne.s32.totalorder %s30, %s33
      %p39 = scmp.eq.s32.totalorder %s20, 0
      %p40 = por %p38, %p39
      %p41 = scmp.ne.s32.totalorder %s30, %s33
      %p42 = scmp.eq.s32.totalorder %s25, 1
      %p43 = por %p41, %p42
      %p44 = scmp.ne.s32.totalorder %s33, %s34
      %p45 = scmp.eq.s32.totalorder %s25, 0
      %p46 = por %p44, %p45
      %p47 = scmp.ne.s32.totalorder %s33, %s34
      %p48 = scmp.eq.s32.totalorder %s26, 1
      %p49 = por %p47, %p48
      %p51 = scmp.ne.s32.totalorder %s34, %s50
      %p52 = scmp.eq.s32.totalorder %s26, 0
      %p53 = por %p51, %p52
      %s54 = ssub.s32 %s20, %s27
      %p55 = scmp.eq.s32.totalorder %s54, 0
      %s57 = sadd.s32 %s56, 1
      %s58 = scalar_select %p55, %s56, %s57
      %p61 = pneg %p55
      %p62 = scmp.eq.s32.totalorder %s20, 1
      %p63 = por %p61, %p62
      %p64 = scmp.ne.s32.totalorder %s56, %s59
      %p65 = scmp.eq.s32.totalorder %s20, 0
      %p66 = por %p64, %p65
      %p67 = scmp.ne.s32.totalorder %s56, %s59
      %p68 = scmp.eq.s32.totalorder %s25, 1
      %p69 = por %p67, %p68
      %p70 = scmp.ne.s32.totalorder %s59, %s60
      %p71 = scmp.eq.s32.totalorder %s25, 0
      %p72 = por %p70, %p71
      %p73 = scmp.ne.s32.totalorder %s59, %s60
      %p74 = scmp.eq.s32.totalorder %s26, 1
      %p75 = por %p73, %p74
      %p77 = scmp.ne.s32.totalorder %s60, %s76
      %p78 = scmp.eq.s32.totalorder %s26, 0
      %p79 = por %p77, %p78
      %s81 = sadd.s32 %s80, 1
      %p84 = scmp.eq.s32.totalorder %s20, 1
      %p85 = scmp.ne.s32.totalorder %s80, %s82
      %p86 = scmp.eq.s32.totalorder %s20, 0
      %p87 = por %p85, %p86
      %p88 = scmp.ne.s32.totalorder %s80, %s82
      %p89 = scmp.eq.s32.totalorder %s25, 1
      %p90 = por %p88, %p89
      %p91 = scmp.ne.s32.totalorder %s82, %s83
      %p92 = scmp.eq.s32.totalorder %s25, 0
      %p93 = por %p91, %p92
      %p94 = scmp.ne.s32.totalorder %s82, %s83
      %p95 = scmp.eq.s32.totalorder %s26, 1
      %p96 = por %p94, %p95
      %p98 = scmp.ne.s32.totalorder %s83, %s97
      %p99 = scmp.eq.s32.totalorder %s26, 0
      %p100 = por %p98, %p99
      %s102 = sadd.s32 %s101, 1
      %p105 = scmp.eq.s32.totalorder %s20, 1
      %p106 = scmp.ne.s32.totalorder %s101, %s103
      %p107 = scmp.eq.s32.totalorder %s20, 0
      %p108 = por %p106, %p107
      %p109 = scmp.ne.s32.totalorder %s101, %s103
      %p110 = scmp.eq.s32.totalorder %s25, 1
      %p111 = por %p109, %p110
      %p112 = scmp.ne.s32.totalorder %s103, %s104
      %p113 = scmp.eq.s32.totalorder %s25, 0
      %p114 = por %p112, %p113
      %p115 = scmp.ne.s32.totalorder %s103, %s104
      %p116 = scmp.eq.s32.totalorder %s26, 1
      %p117 = por %p115, %p116
      %p119 = scmp.ne.s32.totalorder %s104, %s118
      %p120 = scmp.eq.s32.totalorder %s26, 0
      %p121 = por %p119, %p120
      %s123 = sadd.s32 %s122, 1
      %p126 = scmp.eq.s32.totalorder %s20, 1
      %p127 = scmp.ne.s32.totalorder %s122, %s124
      %p128 = scmp.eq.s32.totalorder %s20, 0
      %p129 = por %p127, %p128
      %p130 = scmp.ne.s32.totalorder %s122, %s124
      %p131 = scmp.eq.s32.totalorder %s25, 1
      %p132 = por %p130, %p131
      %p133 = scmp.ne.s32.totalorder %s124, %s125
      %p134 = scmp.eq.s32.totalorder %s25, 0
      %p135 = por %p133, %p134
      %p136 = scmp.ne.s32.totalorder %s124, %s125
      %p137 = scmp.eq.s32.totalorder %s26, 1
      %p138 = por %p136, %p137
      %p140 = scmp.ne.s32.totalorder %s125, %s139
      %p141 = scmp.eq.s32.totalorder %s26, 0
      %p142 = por %p140, %p141
      %s144 = sadd.s32 %s143, 1
      %p147 = scmp.eq.s32.totalorder %s20, 1
      %p148 = scmp.ne.s32.totalorder %s143, %s145
      %p149 = scmp.eq.s32.totalorder %s20, 0
      %p150 = por %p148, %p149
      %p151 = scmp.ne.s32.totalorder %s143, %s145
      %p152 = scmp.eq.s32.totalorder %s25, 1
      %p153 = por %p151, %p152
      %p154 = scmp.ne.s32.totalorder %s145, %s146
      %p155 = scmp.eq.s32.totalorder %s25, 0
      %p156 = por %p154, %p155
      %p157 = scmp.ne.s32.totalorder %s145, %s146
      %p158 = scmp.eq.s32.totalorder %s26, 1
      %p159 = por %p157, %p158
      %p161 = scmp.ne.s32.totalorder %s146, %s160
      %p162 = scmp.eq.s32.totalorder %s26, 0
      %p163 = por %p161, %p162
      %s165 = sadd.s32 %s164, 1
      %p168 = scmp.eq.s32.totalorder %s20, 1
      %p169 = scmp.ne.s32.totalorder %s164, %s166
      %p170 = scmp.eq.s32.totalorder %s20, 0
      %p171 = por %p169, %p170
      %p172 = scmp.ne.s32.totalorder %s164, %s166
      %p173 = scmp.eq.s32.totalorder %s25, 1
      %p174 = por %p172, %p173
      %p175 = scmp.ne.s32.totalorder %s166, %s167
      %p176 = scmp.eq.s32.totalorder %s25, 0
      %p177 = por %p175, %p176
      %p178 = scmp.ne.s32.totalorder %s166, %s167
      %p179 = scmp.eq.s32.totalorder %s26, 1
      %p180 = por %p178, %p179
      %p182 = scmp.ne.s32.totalorder %s167, %s181
      %p183 = scmp.eq.s32.totalorder %s26, 0
      %p184 = por %p182, %p183
      %s186 = sadd.s32 %s185, 1
      %p189 = scmp.eq.s32.totalorder %s20, 1
      %p190 = scmp.ne.s32.totalorder %s185, %s187
      %p191 = scmp.eq.s32.totalorder %s20, 0
      %p192 = por %p190, %p191
      %p193 = scmp.ne.s32.totalorder %s185, %s187
      %p194 = scmp.eq.s32.totalorder %s25, 1
      %p195 = por %p193, %p194
      %p196 = scmp.ne.s32.totalorder %s187, %s188
      %p197 = scmp.eq.s32.totalorder %s25, 0
      %p198 = por %p196, %p197
      %p199 = scmp.ne.s32.totalorder %s187, %s188
      %p200 = scmp.eq.s32.totalorder %s26, 1
      %p201 = por %p199, %p200
      %p203 = scmp.ne.s32.totalorder %s188, %s202
      %p204 = scmp.eq.s32.totalorder %s26, 0
      %p205 = por %p203, %p204
      %s206 = ssub.s32 %s20, %s27
      %p207 = scmp.eq.s32.totalorder %s206, 0
      %s209 = sadd.s32 %s208, 1
      %s210 = scalar_select %p207, %s208, %s209
      %p213 = pneg %p207
      %p214 = scmp.eq.s32.totalorder %s20, 1
      %p215 = por %p213, %p214
      %p216 = scmp.ne.s32.totalorder %s208, %s211
      %p217 = scmp.eq.s32.totalorder %s20, 0
      %p218 = por %p216, %p217
      %p219 = scmp.ne.s32.totalorder %s208, %s211
      %p220 = scmp.eq.s32.totalorder %s25, 1
      %p221 = por %p219, %p220
      %p222 = scmp.ne.s32.totalorder %s211, %s212
      %p223 = scmp.eq.s32.totalorder %s25, 0
      %p224 = por %p222, %p223
      %p225 = scmp.ne.s32.totalorder %s211, %s212
      %p226 = scmp.eq.s32.totalorder %s26, 1
      %p227 = por %p225, %p226
      %p229 = scmp.ne.s32.totalorder %s212, %s228
      %p230 = scmp.eq.s32.totalorder %s26, 0
      %p231 = por %p229, %p230
      %p232 = scmp.le.s32.totalorder 1, %s20
      %p233 = scmp.lt.s32.totalorder %s20, 3
      %p234 = pnand %p232, %p233
      %p235 = pneg %p234
      // Predicated region
      $region9: #{tpu_custom_call.1} parent=5 // pred_check
        _
      $region10: #{tpu_custom_call.1} parent=5 // pred_check_branch
        %237 = sbr.rel (%p234) target = $region12
      $region11: #{tpu_custom_call.1} parent=5 // pred_region
        %s238 = ssub.s32 %s20, 1
        // Predicated region
        $region13: #{tpu_custom_call.1} parent=11 // pred_check
          %p239 = pneg %p93
        $region14: #{tpu_custom_call.1} parent=11 // pred_check_branch
          %241 = sbr.rel (%p239) target = $region16
        $region15: #{tpu_custom_call.1} parent=11 // pred_region
          %s243 = ssub.s32 25088, 25088
          %244 = vsyncadd [#allocation6], %s243
          %s245 = sshll.u32 [#allocation5], 4
          %s246 = int_to_ptr.vmem [resolvable:$true] %s245
          %251 = dma.hbm_to_vmem [thread:$0]  %s2, 25088, %s246, [#allocation6], 256, 256, 16
        $region16: #{tpu_custom_call.1} parent=11 // pred_fallthru
          _
        // Predicated region
        $region17: #{tpu_custom_call.1} parent=11 // pred_check
          %p252 = pneg %p114
        $region18: #{tpu_custom_call.1} parent=11 // pred_check_branch
          %254 = sbr.rel (%p252) target = $region20
        $region19: #{tpu_custom_call.1} parent=11 // pred_region
          _
        $region20: #{tpu_custom_call.1} parent=11 // pred_fallthru
          _
        // Predicated region
        $region21: #{tpu_custom_call.1} parent=11 // pred_check
          %p255 = pneg %p135
        $region22: #{tpu_custom_call.1} parent=11 // pred_check_branch
          %257 = sbr.rel (%p255) target = $region24
        $region23: #{tpu_custom_call.1} parent=11 // pred_region
          %s259 = ssub.s32 8192, 8192
          %260 = vsyncadd [#allocation6], %s259
          %s261 = sshll.u32 [#allocation7], 4
          %s262 = int_to_ptr.vmem [resolvable:$true] %s261
          %267 = dma.hbm_to_vmem [thread:$0]  %s4, 8192, %s262, [#allocation6], 128, 128, 8
        $region24: #{tpu_custom_call.1} parent=11 // pred_fallthru
          _
        // Predicated region
        $region25: #{tpu_custom_call.1} parent=11 // pred_check
          %p268 = pneg %p156
        $region26: #{tpu_custom_call.1} parent=11 // pred_check_branch
          %270 = sbr.rel (%p268) target = $region28
        $region27: #{tpu_custom_call.1} parent=11 // pred_region
          _
        $region28: #{tpu_custom_call.1} parent=11 // pred_fallthru
          _
        // Predicated region
        $region29: #{tpu_custom_call.1} parent=11 // pred_check
          %p271 = pneg %p177
        $region30: #{tpu_custom_call.1} parent=11 // pred_check_branch
          %273 = sbr.rel (%p271) target = $region32
        $region31: #{tpu_custom_call.1} parent=11 // pred_region
          _
        $region32: #{tpu_custom_call.1} parent=11 // pred_fallthru
          _
        // Predicated region
        $region33: #{tpu_custom_call.1} parent=11 // pred_check
          %p274 = pneg %p198
        $region34: #{tpu_custom_call.1} parent=11 // pred_check_branch
          %276 = sbr.rel (%p274) target = $region36
        $region35: #{tpu_custom_call.1} parent=11 // pred_region
          _
        $region36: #{tpu_custom_call.1} parent=11 // pred_fallthru
          _
      $region12: #{tpu_custom_call.1} parent=5 // pred_fallthru
        _
      %p277 = scmp.lt.s32.totalorder %s20, 2
      // Predicated region
      $region37: #{tpu_custom_call.1} parent=5 // pred_check
        %p278 = pneg %p277
      $region38: #{tpu_custom_call.1} parent=5 // pred_check_branch
        %280 = sbr.rel (%p278) target = $region40
      $region39: #{tpu_custom_call.1} parent=5 // pred_region
        // Predicated region
        $region41: #{tpu_custom_call.1} parent=39 // pred_check
          %p281 = pneg %p40
        $region42: #{tpu_custom_call.1} parent=39 // pred_check_branch
          %283 = sbr.rel (%p281) target = $region44
        $region43: #{tpu_custom_call.1} parent=39 // pred_region
          %s284 = sand.u32 %s30, 1
          %s285 = scalar_lea.sflag [#allocation4], %s284
          %s286 = sand.u32 %s30, 1
          %s287 = smul.addr %s286, 112
          %s288 = scalar_lea.vmem [#allocation3], %s287
          %s289 = smul.u32 2, %s20
          %s290 = ssub.s32 3, %s289
          %p291 = scmp.lt.s32.totalorder %s290, 2
          %s292 = scalar_select %p291, %s290, 2
          %s293 = smul.u32 128, %s292
          %s294 = smul.u32 %s293, 7
          %s296 = ssub.s32 1792, %s294
          %297 = vsyncadd %s285, %s296
          %p298 = scmp.ne.s32.totalorder 0, %s294
          %s299 = smul.addr %s289, 7
          %s300 = smul.addr %s299, 128
          %s301 = scalar_lea.hbm %s0, %s300
          %s302 = smul.u32 56, %s292
          %s303 = sshll.u32 %s288, 4
          %s304 = int_to_ptr.vmem [resolvable:$true] %s303
          %s305 = sshll.u32 %s302, 4
          %309 = dma.hbm_to_vmem [thread:$0]  (%p298), %s301, %s305, %s304, %s285, 896, 896, 56
        $region44: #{tpu_custom_call.1} parent=39 // pred_fallthru
          _
        // Predicated region
        $region45: #{tpu_custom_call.1} parent=39 // pred_check
          %p310 = pneg %p66
        $region46: #{tpu_custom_call.1} parent=39 // pred_check_branch
          %312 = sbr.rel (%p310) target = $region48
        $region47: #{tpu_custom_call.1} parent=39 // pred_region
          %s313 = smul.u32 2, %s20
          %s314 = ssub.s32 3, %s313
          %p315 = scmp.lt.s32.totalorder %s314, 2
          %s316 = scalar_select %p315, %s314, 2
          %s317 = smul.u32 128, %s316
          %p318 = scmp.lt.s32.totalorder %s313, 2
          %s319 = scalar_select %p318, %s313, 2
          %s320 = smul.addr %s319, 8
          %s321 = scalar_lea.vmem %s1, %s320
          %s322 = smul.u32 2, %s20
          %s323 = ssub.s32 3, %s322
          %p324 = scmp.lt.s32.totalorder %s323, 2
          %s325 = scalar_select %p324, %s323, 2
          %s326 = smul.u32 128, %s325
        $region48: #{tpu_custom_call.1} parent=39 // pred_fallthru
          _
      $region40: #{tpu_custom_call.1} parent=5 // pred_fallthru
        _
      %p327 = scmp.le.s32.totalorder 1, %s20
      %p328 = scmp.lt.s32.totalorder %s20, 3
      %p329 = pnand %p327, %p328
      %p330 = pneg %p329
      // Predicated region
      $region49: #{tpu_custom_call.1} parent=5 // pred_check
        _
      $region50: #{tpu_custom_call.1} parent=5 // pred_check_branch
        %332 = sbr.rel (%p329) target = $region52
      $region51: #{tpu_custom_call.1} parent=5 // pred_region
        %s333 = ssub.s32 %s20, 1
        %s334 = sand.u32 %s33, 1
        %s335 = scalar_lea.sflag [#allocation4], %s334
        %s336 = sand.u32 %s33, 1
        %s337 = smul.addr %s336, 112
        %s338 = scalar_lea.vmem [#allocation3], %s337
        // Predicated region
        $region53: #{tpu_custom_call.1} parent=51 // pred_check
          %p339 = pneg %p46
        $region54: #{tpu_custom_call.1} parent=51 // pred_check_branch
          %341 = sbr.rel (%p339) target = $region56
        $region55: #{tpu_custom_call.1} parent=51 // pred_region
          %342 = dma.done %s335, 1792
        $region56: #{tpu_custom_call.1} parent=51 // pred_fallthru
          _
        // Predicated region
        $region57: #{tpu_custom_call.1} parent=51 // pred_check
          %p343 = pneg %p93
        $region58: #{tpu_custom_call.1} parent=51 // pred_check_branch
          %345 = sbr.rel (%p343) target = $region60
        $region59: #{tpu_custom_call.1} parent=51 // pred_region
          %346 = dma.done [#allocation6], 25088
        $region60: #{tpu_custom_call.1} parent=51 // pred_fallthru
          _
        // Predicated region
        $region61: #{tpu_custom_call.1} parent=51 // pred_check
          %p347 = pneg %p135
        $region62: #{tpu_custom_call.1} parent=51 // pred_check_branch
          %349 = sbr.rel (%p347) target = $region64
        $region63: #{tpu_custom_call.1} parent=51 // pred_region
          %350 = dma.done [#allocation6], 8192
        $region64: #{tpu_custom_call.1} parent=51 // pred_fallthru
          _
        %s351 = sand.u32 %s33, 1
        %s352 = scalar_lea.sflag [#allocation4], %s351
        %s353 = sand.u32 %s33, 1
        %s354 = smul.addr %s353, 112
        %s355 = scalar_lea.vmem [#allocation3], %s354
        %p356 = pneg %p46
        %p357 = pneg %p43
        %s358 = smul.u32 2, %s25
        %s359 = ssub.s32 3, %s358
        %p360 = scmp.lt.s32.totalorder %s359, 2
        %s361 = scalar_select %p360, %s359, 2
        %s362 = smul.u32 128, %s361
        %p363 = scmp.lt.s32.totalorder %s358, 2
        %s364 = scalar_select %p363, %s358, 2
        %s365 = smul.addr %s364, 8
        %s366 = scalar_lea.vmem %s1, %s365
        %p367 = pneg %p72
        %p368 = pneg %p69
        %p369 = pneg %p93
        %p370 = pneg %p90
        %p371 = pneg %p114
        %p372 = pneg %p111
        %p373 = pneg %p135
        %p374 = pneg %p132
        %p375 = pneg %p156
        %p376 = pneg %p153
        %p377 = pneg %p177
        %p378 = pneg %p174
        %p379 = pneg %p198
        %p380 = pneg %p195
        %p381 = pneg %p224
        %p382 = pneg %p221
        %s383 = sand.u32 %s211, 1
        %s384 = sand.u32 %s211, 1
        %s385 = smul.addr %s384, 16
        %s386 = scalar_lea.vmem [#allocation8], %s385
        %s387 = smul.u32 2, %s25
        %s388 = ssub.s32 3, %s387
        %p389 = scmp.lt.s32.totalorder %s388, 2
        %s390 = scalar_select %p389, %s388, 2
        %s391 = smul.u32 128, %s390
        %s392 = smul.u32 %s391, 7
        %s393 = smul.u32 2, %s25
        %s394 = ssub.s32 3, %s393
        %p395 = scmp.lt.s32.totalorder %s394, 2
        %s396 = scalar_select %p395, %s394, 2
        %s397 = smul.u32 128, %s396
        %p398 = scmp.lt.s32.totalorder %s393, 2
        %s399 = scalar_select %p398, %s393, 2
        %s400 = smul.addr %s399, 8
        %s401 = scalar_lea.vmem %s1, %s400
        %s402 = smul.u32 2, %s25
        %s403 = ssub.s32 3, %s402
        %p404 = scmp.lt.s32.totalorder %s403, 2
        %s405 = scalar_select %p404, %s403, 2
        %s406 = smul.u32 128, %s405
        %s407 = smul.u32 2, %s25
        %s408 = ssub.s32 3, %s407
        %p409 = scmp.lt.s32.totalorder %s408, 2
        %s410 = scalar_select %p409, %s408, 2
        %s411 = smul.u32 128, %s410
        %v413 = vld [vmem:[%s338] sm:$0xff]
        %v414 = vld [vmem:[%s338 + $0x8] sm:$0xff]
        %v415 = vld [vmem:[%s338 + $0x10] sm:$0xff]
        %v416 = vld [vmem:[%s338 + $0x18] sm:$0xff]
        %v417 = vld [vmem:[%s338 + $0x20] sm:$0xff]
        %v418 = vld [vmem:[%s338 + $0x28] sm:$0xff]
        %v419 = vld [vmem:[%s338 + $0x30] sm:$0xff]
        %v420 = vld [vmem:[%s338 + $0x38] sm:$0xff]
        %v421 = vld [vmem:[%s338 + $0x40] sm:$0xff]
        %v422 = vld [vmem:[%s338 + $0x48] sm:$0xff]
        %v423 = vld [vmem:[%s338 + $0x50] sm:$0xff]
        %v424 = vld [vmem:[%s338 + $0x58] sm:$0xff]
        %v425 = vld [vmem:[%s338 + $0x60] sm:$0xff]
        %v426 = vld [vmem:[%s338 + $0x68] sm:$0xff]
        %v427 = vpack.c.bf16 %v420, %v413
        %v428 = vpack.c.bf16 %v421, %v414
        %v429 = vpack.c.bf16 %v422, %v415
        %v430 = vpack.c.bf16 %v423, %v416
        %v431 = vpack.c.bf16 %v424, %v417
        %v432 = vpack.c.bf16 %v425, %v418
        %v433 = vpack.c.bf16 %v426, %v419
        %v434 = vld [vmem:[%s401] sm:$0xff]
        %v435 = vld [vmem:[%s401 + $0x8] sm:$0xff]
        %v436 = vlaneseq
        %v437 = vand.u32 %v436, 127
        %438 = vset.pattern.permute.xlu0 0
        %439 = vperm.xlu0 %438, %v434
        %v440 = vpop.permute.xlu0 %439
        %441 = vset.pattern.permute.xlu0 0
        %442 = vperm.xlu0 %441, %v435
        %v443 = vpop.permute.xlu0 %442
        %vm444 = vcmp.eq.s32.totalorder %v437, %v440
        %vm445 = vcmp.eq.s32.totalorder %v437, %v443
        %v446 = vsel %vm444, 1, 0
        %v447 = vsel %vm445, 1, 0
        %v448 = vcvt.s32.f32 %v446
        %v449 = vcvt.s32.f32 %v447
        %v450 = vpack.c.bf16 %v449, %v448
        %v451 = vld [vmem:[#allocation5] sm:$0xff]
        %v452 = vld [vmem:[#allocation5 + $0x8] sm:$0xff]
        %v453 = vld [vmem:[#allocation5 + $0x10] sm:$0xff]
        %v454 = vld [vmem:[#allocation5 + $0x18] sm:$0xff]
        %v455 = vld [vmem:[#allocation5 + $0x20] sm:$0xff]
        %v456 = vld [vmem:[#allocation5 + $0x28] sm:$0xff]
        %v457 = vld [vmem:[#allocation5 + $0x30] sm:$0xff]
        %v458 = vld [vmem:[#allocation5 + $0x38] sm:$0xff]
        %v459 = vld [vmem:[#allocation5 + $0x40] sm:$0xff]
        %v460 = vld [vmem:[#allocation5 + $0x48] sm:$0xff]
        %v461 = vld [vmem:[#allocation5 + $0x50] sm:$0xff]
        %v462 = vld [vmem:[#allocation5 + $0x58] sm:$0xff]
        %v463 = vld [vmem:[#allocation5 + $0x60] sm:$0xff]
        %v464 = vld [vmem:[#allocation5 + $0x68] sm:$0xff]
        %v465 = vld [vmem:[#allocation5 + $0x70] sm:$0xff]
        %v466 = vld [vmem:[#allocation5 + $0x78] sm:$0xff]
        %v467 = vld [vmem:[#allocation5 + $0x80] sm:$0xff]
        %v468 = vld [vmem:[#allocation5 + $0x88] sm:$0xff]
        %v469 = vld [vmem:[#allocation5 + $0x90] sm:$0xff]
        %v470 = vld [vmem:[#allocation5 + $0x98] sm:$0xff]
        %v471 = vld [vmem:[#allocation5 + $0xa0] sm:$0xff]
        %v472 = vld [vmem:[#allocation5 + $0xa8] sm:$0xff]
        %v473 = vld [vmem:[#allocation5 + $0xb0] sm:$0xff]
        %v474 = vld [vmem:[#allocation5 + $0xb8] sm:$0xff]
        %v475 = vld [vmem:[#allocation5 + $0xc0] sm:$0xff]
        %v476 = vld [vmem:[#allocation5 + $0xc8] sm:$0xff]
        %v477 = vld [vmem:[#allocation5 + $0xd0] sm:$0xff]
        %v478 = vld [vmem:[#allocation5 + $0xd8] sm:$0xff]
        %v479 = vld [vmem:[#allocation5 + $0xe0] sm:$0xff]
        %v480 = vld [vmem:[#allocation5 + $0xe8] sm:$0xff]
        %v481 = vld [vmem:[#allocation5 + $0xf0] sm:$0xff]
        %v482 = vld [vmem:[#allocation5 + $0xf8] sm:$0xff]
        %v483 = vld [vmem:[#allocation5 + $0x100] sm:$0xff]
        %v484 = vld [vmem:[#allocation5 + $0x108] sm:$0xff]
        %v485 = vld [vmem:[#allocation5 + $0x110] sm:$0xff]
        %v486 = vld [vmem:[#allocation5 + $0x118] sm:$0xff]
        %v487 = vld [vmem:[#allocation5 + $0x120] sm:$0xff]
        %v488 = vld [vmem:[#allocation5 + $0x128] sm:$0xff]
        %v489 = vld [vmem:[#allocation5 + $0x130] sm:$0xff]
        %v490 = vld [vmem:[#allocation5 + $0x138] sm:$0xff]
        %v491 = vld [vmem:[#allocation5 + $0x140] sm:$0xff]
        %v492 = vld [vmem:[#allocation5 + $0x148] sm:$0xff]
        %v493 = vld [vmem:[#allocation5 + $0x150] sm:$0xff]
        %v494 = vld [vmem:[#allocation5 + $0x158] sm:$0xff]
        %v495 = vld [vmem:[#allocation5 + $0x160] sm:$0xff]
        %v496 = vld [vmem:[#allocation5 + $0x168] sm:$0xff]
        %v497 = vld [vmem:[#allocation5 + $0x170] sm:$0xff]
        %v498 = vld [vmem:[#allocation5 + $0x178] sm:$0xff]
        %v499 = vld [vmem:[#allocation5 + $0x180] sm:$0xff]
        %v500 = vld [vmem:[#allocation5 + $0x188] sm:$0xff]
        %v501 = vld [vmem:[#allocation5 + $0x190] sm:$0xff]
        %v502 = vld [vmem:[#allocation5 + $0x198] sm:$0xff]
        %v503 = vld [vmem:[#allocation5 + $0x1a0] sm:$0xff]
        %v504 = vld [vmem:[#allocation5 + $0x1a8] sm:$0xff]
        %v505 = vld [vmem:[#allocation5 + $0x1b0] sm:$0xff]
        %v506 = vld [vmem:[#allocation5 + $0x1b8] sm:$0xff]
        %v507 = vld [vmem:[#allocation5 + $0x1c0] sm:$0xff]
        %v508 = vld [vmem:[#allocation5 + $0x1c8] sm:$0xff]
        %v509 = vld [vmem:[#allocation5 + $0x1d0] sm:$0xff]
        %v510 = vld [vmem:[#allocation5 + $0x1d8] sm:$0xff]
        %v511 = vld [vmem:[#allocation5 + $0x1e0] sm:$0xff]
        %v512 = vld [vmem:[#allocation5 + $0x1e8] sm:$0xff]
        %v513 = vld [vmem:[#allocation5 + $0x1f0] sm:$0xff]
        %v514 = vld [vmem:[#allocation5 + $0x1f8] sm:$0xff]
        %v515 = vld [vmem:[#allocation5 + $0x200] sm:$0xff]
        %v516 = vld [vmem:[#allocation5 + $0x208] sm:$0xff]
        %v517 = vld [vmem:[#allocation5 + $0x210] sm:$0xff]
        %v518 = vld [vmem:[#allocation5 + $0x218] sm:$0xff]
        %v519 = vld [vmem:[#allocation5 + $0x220] sm:$0xff]
        %v520 = vld [vmem:[#allocation5 + $0x228] sm:$0xff]
        %v521 = vld [vmem:[#allocation5 + $0x230] sm:$0xff]
        %v522 = vld [vmem:[#allocation5 + $0x238] sm:$0xff]
        %v523 = vld [vmem:[#allocation5 + $0x240] sm:$0xff]
        %v524 = vld [vmem:[#allocation5 + $0x248] sm:$0xff]
        %v525 = vld [vmem:[#allocation5 + $0x250] sm:$0xff]
        %v526 = vld [vmem:[#allocation5 + $0x258] sm:$0xff]
        %v527 = vld [vmem:[#allocation5 + $0x260] sm:$0xff]
        %v528 = vld [vmem:[#allocation5 + $0x268] sm:$0xff]
        %v529 = vld [vmem:[#allocation5 + $0x270] sm:$0xff]
        %v530 = vld [vmem:[#allocation5 + $0x278] sm:$0xff]
        %v531 = vld [vmem:[#allocation5 + $0x280] sm:$0xff]
        %v532 = vld [vmem:[#allocation5 + $0x288] sm:$0xff]
        %v533 = vld [vmem:[#allocation5 + $0x290] sm:$0xff]
        %v534 = vld [vmem:[#allocation5 + $0x298] sm:$0xff]
        %v535 = vld [vmem:[#allocation5 + $0x2a0] sm:$0xff]
        %v536 = vld [vmem:[#allocation5 + $0x2a8] sm:$0xff]
        %v537 = vld [vmem:[#allocation5 + $0x2b0] sm:$0xff]
        %v538 = vld [vmem:[#allocation5 + $0x2b8] sm:$0xff]
        %v539 = vld [vmem:[#allocation5 + $0x2c0] sm:$0xff]
        %v540 = vld [vmem:[#allocation5 + $0x2c8] sm:$0xff]
        %v541 = vld [vmem:[#allocation5 + $0x2d0] sm:$0xff]
        %v542 = vld [vmem:[#allocation5 + $0x2d8] sm:$0xff]
        %v543 = vld [vmem:[#allocation5 + $0x2e0] sm:$0xff]
        %v544 = vld [vmem:[#allocation5 + $0x2e8] sm:$0xff]
        %v545 = vld [vmem:[#allocation5 + $0x2f0] sm:$0xff]
        %v546 = vld [vmem:[#allocation5 + $0x2f8] sm:$0xff]
        %v547 = vld [vmem:[#allocation5 + $0x300] sm:$0xff]
        %v548 = vld [vmem:[#allocation5 + $0x308] sm:$0xff]
        %v549 = vld [vmem:[#allocation5 + $0x310] sm:$0xff]
        %v550 = vld [vmem:[#allocation5 + $0x318] sm:$0xff]
        %v551 = vld [vmem:[#allocation5 + $0x320] sm:$0xff]
        %v552 = vld [vmem:[#allocation5 + $0x328] sm:$0xff]
        %v553 = vld [vmem:[#allocation5 + $0x330] sm:$0xff]
        %v554 = vld [vmem:[#allocation5 + $0x338] sm:$0xff]
        %v555 = vld [vmem:[#allocation5 + $0x340] sm:$0xff]
        %v556 = vld [vmem:[#allocation5 + $0x348] sm:$0xff]
        %v557 = vld [vmem:[#allocation5 + $0x350] sm:$0xff]
        %v558 = vld [vmem:[#allocation5 + $0x358] sm:$0xff]
        %v559 = vld [vmem:[#allocation5 + $0x360] sm:$0xff]
        %v560 = vld [vmem:[#allocation5 + $0x368] sm:$0xff]
        %v561 = vld [vmem:[#allocation5 + $0x370] sm:$0xff]
        %v562 = vld [vmem:[#allocation5 + $0x378] sm:$0xff]
        %v563 = vld [vmem:[#allocation5 + $0x380] sm:$0xff]
        %v564 = vld [vmem:[#allocation5 + $0x388] sm:$0xff]
        %v565 = vld [vmem:[#allocation5 + $0x390] sm:$0xff]
        %v566 = vld [vmem:[#allocation5 + $0x398] sm:$0xff]
        %v567 = vld [vmem:[#allocation5 + $0x3a0] sm:$0xff]
        %v568 = vld [vmem:[#allocation5 + $0x3a8] sm:$0xff]
        %v569 = vld [vmem:[#allocation5 + $0x3b0] sm:$0xff]
        %v570 = vld [vmem:[#allocation5 + $0x3b8] sm:$0xff]
        %v571 = vld [vmem:[#allocation5 + $0x3c0] sm:$0xff]
        %v572 = vld [vmem:[#allocation5 + $0x3c8] sm:$0xff]
        %v573 = vld [vmem:[#allocation5 + $0x3d0] sm:$0xff]
        %v574 = vld [vmem:[#allocation5 + $0x3d8] sm:$0xff]
        %v575 = vld [vmem:[#allocation5 + $0x3e0] sm:$0xff]
        %v576 = vld [vmem:[#allocation5 + $0x3e8] sm:$0xff]
        %v577 = vld [vmem:[#allocation5 + $0x3f0] sm:$0xff]
        %v578 = vld [vmem:[#allocation5 + $0x3f8] sm:$0xff]
        %v579 = vld [vmem:[#allocation5 + $0x400] sm:$0xff]
        %v580 = vld [vmem:[#allocation5 + $0x408] sm:$0xff]
        %v581 = vld [vmem:[#allocation5 + $0x410] sm:$0xff]
        %v582 = vld [vmem:[#allocation5 + $0x418] sm:$0xff]
        %v583 = vld [vmem:[#allocation5 + $0x420] sm:$0xff]
        %v584 = vld [vmem:[#allocation5 + $0x428] sm:$0xff]
        %v585 = vld [vmem:[#allocation5 + $0x430] sm:$0xff]
        %v586 = vld [vmem:[#allocation5 + $0x438] sm:$0xff]
        %v587 = vld [vmem:[#allocation5 + $0x440] sm:$0xff]
        %v588 = vld [vmem:[#allocation5 + $0x448] sm:$0xff]
        %v589 = vld [vmem:[#allocation5 + $0x450] sm:$0xff]
        %v590 = vld [vmem:[#allocation5 + $0x458] sm:$0xff]
        %v591 = vld [vmem:[#allocation5 + $0x460] sm:$0xff]
        %v592 = vld [vmem:[#allocation5 + $0x468] sm:$0xff]
        %v593 = vld [vmem:[#allocation5 + $0x470] sm:$0xff]
        %v594 = vld [vmem:[#allocation5 + $0x478] sm:$0xff]
        %v595 = vld [vmem:[#allocation5 + $0x480] sm:$0xff]
        %v596 = vld [vmem:[#allocation5 + $0x488] sm:$0xff]
        %v597 = vld [vmem:[#allocation5 + $0x490] sm:$0xff]
        %v598 = vld [vmem:[#allocation5 + $0x498] sm:$0xff]
        %v599 = vld [vmem:[#allocation5 + $0x4a0] sm:$0xff]
        %v600 = vld [vmem:[#allocation5 + $0x4a8] sm:$0xff]
        %v601 = vld [vmem:[#allocation5 + $0x4b0] sm:$0xff]
        %v602 = vld [vmem:[#allocation5 + $0x4b8] sm:$0xff]
        %v603 = vld [vmem:[#allocation5 + $0x4c0] sm:$0xff]
        %v604 = vld [vmem:[#allocation5 + $0x4c8] sm:$0xff]
        %v605 = vld [vmem:[#allocation5 + $0x4d0] sm:$0xff]
        %v606 = vld [vmem:[#allocation5 + $0x4d8] sm:$0xff]
        %v607 = vld [vmem:[#allocation5 + $0x4e0] sm:$0xff]
        %v608 = vld [vmem:[#allocation5 + $0x4e8] sm:$0xff]
        %v609 = vld [vmem:[#allocation5 + $0x4f0] sm:$0xff]
        %v610 = vld [vmem:[#allocation5 + $0x4f8] sm:$0xff]
        %v611 = vld [vmem:[#allocation5 + $0x500] sm:$0xff]
        %v612 = vld [vmem:[#allocation5 + $0x508] sm:$0xff]
        %v613 = vld [vmem:[#allocation5 + $0x510] sm:$0xff]
        %v614 = vld [vmem:[#allocation5 + $0x518] sm:$0xff]
        %v615 = vld [vmem:[#allocation5 + $0x520] sm:$0xff]
        %v616 = vld [vmem:[#allocation5 + $0x528] sm:$0xff]
        %v617 = vld [vmem:[#allocation5 + $0x530] sm:$0xff]
        %v618 = vld [vmem:[#allocation5 + $0x538] sm:$0xff]
        %v619 = vld [vmem:[#allocation5 + $0x540] sm:$0xff]
        %v620 = vld [vmem:[#allocation5 + $0x548] sm:$0xff]
        %v621 = vld [vmem:[#allocation5 + $0x550] sm:$0xff]
        %v622 = vld [vmem:[#allocation5 + $0x558] sm:$0xff]
        %v623 = vld [vmem:[#allocation5 + $0x560] sm:$0xff]
        %v624 = vld [vmem:[#allocation5 + $0x568] sm:$0xff]
        %v625 = vld [vmem:[#allocation5 + $0x570] sm:$0xff]
        %v626 = vld [vmem:[#allocation5 + $0x578] sm:$0xff]
        %v627 = vld [vmem:[#allocation5 + $0x580] sm:$0xff]
        %v628 = vld [vmem:[#allocation5 + $0x588] sm:$0xff]
        %v629 = vld [vmem:[#allocation5 + $0x590] sm:$0xff]
        %v630 = vld [vmem:[#allocation5 + $0x598] sm:$0xff]
        %v631 = vld [vmem:[#allocation5 + $0x5a0] sm:$0xff]
        %v632 = vld [vmem:[#allocation5 + $0x5a8] sm:$0xff]
        %v633 = vld [vmem:[#allocation5 + $0x5b0] sm:$0xff]
        %v634 = vld [vmem:[#allocation5 + $0x5b8] sm:$0xff]
        %v635 = vld [vmem:[#allocation5 + $0x5c0] sm:$0xff]
        %v636 = vld [vmem:[#allocation5 + $0x5c8] sm:$0xff]
        %v637 = vld [vmem:[#allocation5 + $0x5d0] sm:$0xff]
        %v638 = vld [vmem:[#allocation5 + $0x5d8] sm:$0xff]
        %v639 = vld [vmem:[#allocation5 + $0x5e0] sm:$0xff]
        %v640 = vld [vmem:[#allocation5 + $0x5e8] sm:$0xff]
        %v641 = vld [vmem:[#allocation5 + $0x5f0] sm:$0xff]
        %v642 = vld [vmem:[#allocation5 + $0x5f8] sm:$0xff]
        %v643 = vld [vmem:[#allocation5 + $0x600] sm:$0xff]
        %v644 = vld [vmem:[#allocation5 + $0x608] sm:$0xff]
        %v645 = vld [vmem:[#allocation5 + $0x610] sm:$0xff]
        %v646 = vld [vmem:[#allocation5 + $0x618] sm:$0xff]
        %v647 = vld [vmem:[%s3] sm:$0xff]
        %v648 = vld [vmem:[%s3 + $0x8] sm:$0xff]
        %v649 = vld [vmem:[%s3 + $0x10] sm:$0x11]
        %v650 = vld [vmem:[%s3 + $0x18] sm:$0x11]
        %v655 = vunpack.c.l.b16 %v647
        %v656 = vunpack.c.h.b16 %v647
        %v657 = vunpack.c.l.b16 %v648
        %v658 = vunpack.c.h.b16 %v648
        %v659 = vunpack.c.l.b16 %v649
        %v660 = vunpack.c.h.b16 %v649
        %v661 = vunpack.c.l.b16 %v650
        %v662 = vunpack.c.h.b16 %v650
        %v663 = vpack.c.b16 %v659, %v655
        %v664 = vpack.c.b16 %v660, %v656
        %v665 = vpack.c.b16 %v661, %v657
        %v666 = vpack.c.b16 %v662, %v658
        %vm667 = vcmask 80896
        %v669 = vsel %vm667, %v450, 0
        %vm671 = vcmask 1044480
        %v673 = vsel %vm671, %v663, 0
        %v676 = vsel %vm671, %v664, 0
        %v679 = vsel %vm671, %v665, 0
        %v682 = vsel %vm671, %v666, 0
        %684 = vmatprep.subr.bf16.mxu0 %v676
        %685 = vmatpush1.bf16.msra.mxu0 %v673
        %686 = vmatprep.subr.bf16.mxu0 0
        %687 = vmatpush1.bf16.msra.mxu0 0
        %688 = vmatprep.subr.bf16.mxu0 0
        %689 = vmatpush1.bf16.msra.mxu0 0
        %690 = vmatprep.subr.bf16.mxu0 0
        %691 = vmatpush1.bf16.msra.mxu0 0
        %692 = vmatprep.subr.bf16.mxu0 0
        %693 = vmatpush1.bf16.msra.mxu0 0
        %694 = vmatprep.subr.bf16.mxu0 0
        %695 = vmatpush1.bf16.msra.mxu0 0
        %696 = vmatprep.subr.bf16.mxu0 0
        %697 = vmatpush1.bf16.msra.mxu0 0
        %698 = vmatprep.subr.bf16.mxu0 0
        %699 = vmatpush1.bf16.msra.mxu0 0
        %700 = vmatprep.subr.bf16.mxu0 0
        %701 = vmatpush1.bf16.msra.mxu0 0
        %702 = vmatprep.subr.bf16.mxu0 0
        %703 = vmatpush1.bf16.msra.mxu0 0
        %704 = vmatprep.subr.bf16.mxu0 0
        %705 = vmatpush1.bf16.msra.mxu0 0
        %706 = vmatprep.subr.bf16.mxu0 0
        %707 = vmatpush1.bf16.msra.mxu0 0
        %708 = vmatprep.subr.bf16.mxu0 0
        %709 = vmatpush1.bf16.msra.mxu0 0
        %710 = vmatprep.subr.bf16.mxu0 0
        %711 = vmatpush1.bf16.msra.mxu0 0
        %712 = vmatprep.subr.bf16.mxu0 0
        %713 = vmatpush1.bf16.msra.mxu0 0
        %714 = vmatprep.subr.bf16.mxu0 0
        %715 = vmatpush1.bf16.msra.mxu0 0
        %716 = vmatprep.mubr.bf16.mxu0 0
        %717 = vmatmul.mubr.bf16.gmra.mrb[0].mxu0 %v669
        %v718 = vpop.f32.mrb[0].mxu0
        %v719 = vadd.f32 0.0, %v718
        %v720 = vpop.f32.mrb[0].mxu0
        %v721 = vadd.f32 0.0, %v720
        %v722 = vpop.f32.mrb[0].mxu0
        %v723 = vadd.f32 0.0, %v722
        %v724 = vpop.f32.mrb[0].mxu0
        %v725 = vadd.f32 0.0, %v724
        %726 = vdwg.mxu0
        %727 = vmatprep.subr.bf16.mxu0 %v682
        %728 = vmatpush1.bf16.msra.mxu0 %v679
        %729 = vmatprep.subr.bf16.mxu0 0
        %730 = vmatpush1.bf16.msra.mxu0 0
        %731 = vmatprep.subr.bf16.mxu0 0
        %732 = vmatpush1.bf16.msra.mxu0 0
        %733 = vmatprep.subr.bf16.mxu0 0
        %734 = vmatpush1.bf16.msra.mxu0 0
        %735 = vmatprep.subr.bf16.mxu0 0
        %736 = vmatpush1.bf16.msra.mxu0 0
        %737 = vmatprep.subr.bf16.mxu0 0
        %738 = vmatpush1.bf16.msra.mxu0 0
        %739 = vmatprep.subr.bf16.mxu0 0
        %740 = vmatpush1.bf16.msra.mxu0 0
        %741 = vmatprep.subr.bf16.mxu0 0
        %742 = vmatpush1.bf16.msra.mxu0 0
        %743 = vmatprep.subr.bf16.mxu0 0
        %744 = vmatpush1.bf16.msra.mxu0 0
        %745 = vmatprep.subr.bf16.mxu0 0
        %746 = vmatpush1.bf16.msra.mxu0 0
        %747 = vmatprep.subr.bf16.mxu0 0
        %748 = vmatpush1.bf16.msra.mxu0 0
        %749 = vmatprep.subr.bf16.mxu0 0
        %750 = vmatpush1.bf16.msra.mxu0 0
        %751 = vmatprep.subr.bf16.mxu0 0
        %752 = vmatpush1.bf16.msra.mxu0 0
        %753 = vmatprep.subr.bf16.mxu0 0
        %754 = vmatpush1.bf16.msra.mxu0 0
        %755 = vmatprep.subr.bf16.mxu0 0
        %756 = vmatpush1.bf16.msra.mxu0 0
        %757 = vmatprep.subr.bf16.mxu0 0
        %758 = vmatpush1.bf16.msra.mxu0 0
        %759 = vmatprep.mubr.bf16.mxu0 0
        %760 = vmatmul.mubr.bf16.gmra.mrb[0].mxu0 %v669
        %v761 = vpop.f32.mrb[0].mxu0
        %v762 = vadd.f32 0.0, %v761
        %v763 = vpop.f32.mrb[0].mxu0
        %v764 = vadd.f32 0.0, %v763
        %v765 = vpop.f32.mrb[0].mxu0
        %v766 = vadd.f32 0.0, %v765
        %v767 = vpop.f32.mrb[0].mxu0
        %v768 = vadd.f32 0.0, %v767
        %769 = vdwg.mxu0
        %v966 = vunpack.c.l.b16 %v451
        %v967 = vunpack.c.h.b16 %v451
        %v968 = vunpack.c.l.b16 %v452
        %v969 = vunpack.c.h.b16 %v452
        %v970 = vunpack.c.l.b16 %v453
        %v971 = vunpack.c.h.b16 %v453
        %v972 = vunpack.c.l.b16 %v454
        %v973 = vunpack.c.h.b16 %v454
        %v974 = vunpack.c.l.b16 %v455
        %v975 = vunpack.c.h.b16 %v455
        %v976 = vunpack.c.l.b16 %v456
        %v977 = vunpack.c.h.b16 %v456
        %v978 = vunpack.c.l.b16 %v457
        %v979 = vunpack.c.h.b16 %v457
        %v980 = vunpack.c.l.b16 %v458
        %v981 = vunpack.c.h.b16 %v458
        %v982 = vunpack.c.l.b16 %v459
        %v983 = vunpack.c.h.b16 %v459
        %v984 = vunpack.c.l.b16 %v460
        %v985 = vunpack.c.h.b16 %v460
        %v986 = vunpack.c.l.b16 %v461
        %v987 = vunpack.c.h.b16 %v461
        %v988 = vunpack.c.l.b16 %v462
        %v989 = vunpack.c.h.b16 %v462
        %v990 = vunpack.c.l.b16 %v463
        %v991 = vunpack.c.h.b16 %v463
        %v992 = vunpack.c.l.b16 %v464
        %v993 = vunpack.c.h.b16 %v464
        %v994 = vunpack.c.l.b16 %v465
        %v995 = vunpack.c.h.b16 %v465
        %v996 = vunpack.c.l.b16 %v466
        %v997 = vunpack.c.h.b16 %v466
        %v998 = vunpack.c.l.b16 %v467
        %v999 = vunpack.c.h.b16 %v467
        %v1000 = vunpack.c.l.b16 %v468
        %v1001 = vunpack.c.h.b16 %v468
        %v1002 = vunpack.c.l.b16 %v469
        %v1003 = vunpack.c.h.b16 %v469
        %v1004 = vunpack.c.l.b16 %v470
        %v1005 = vunpack.c.h.b16 %v470
        %v1006 = vunpack.c.l.b16 %v471
        %v1007 = vunpack.c.h.b16 %v471
        %v1008 = vunpack.c.l.b16 %v472
        %v1009 = vunpack.c.h.b16 %v472
        %v1010 = vunpack.c.l.b16 %v473
        %v1011 = vunpack.c.h.b16 %v473
        %v1012 = vunpack.c.l.b16 %v474
        %v1013 = vunpack.c.h.b16 %v474
        %v1014 = vunpack.c.l.b16 %v475
        %v1015 = vunpack.c.h.b16 %v475
        %v1016 = vunpack.c.l.b16 %v476
        %v1017 = vunpack.c.h.b16 %v476
        %v1018 = vunpack.c.l.b16 %v477
        %v1019 = vunpack.c.h.b16 %v477
        %v1020 = vunpack.c.l.b16 %v478
        %v1021 = vunpack.c.h.b16 %v478
        %v1022 = vunpack.c.l.b16 %v479
        %v1023 = vunpack.c.h.b16 %v479
        %v1024 = vunpack.c.l.b16 %v480
        %v1025 = vunpack.c.h.b16 %v480
        %v1026 = vunpack.c.l.b16 %v481
        %v1027 = vunpack.c.h.b16 %v481
        %v1028 = vunpack.c.l.b16 %v482
        %v1029 = vunpack.c.h.b16 %v482
        %v1030 = vunpack.c.l.b16 %v483
        %v1031 = vunpack.c.h.b16 %v483
        %v1032 = vunpack.c.l.b16 %v484
        %v1033 = vunpack.c.h.b16 %v484
        %v1034 = vunpack.c.l.b16 %v485
        %v1035 = vunpack.c.h.b16 %v485
        %v1036 = vunpack.c.l.b16 %v486
        %v1037 = vunpack.c.h.b16 %v486
        %v1038 = vunpack.c.l.b16 %v487
        %v1039 = vunpack.c.h.b16 %v487
        %v1040 = vunpack.c.l.b16 %v488
        %v1041 = vunpack.c.h.b16 %v488
        %v1042 = vunpack.c.l.b16 %v489
        %v1043 = vunpack.c.h.b16 %v489
        %v1044 = vunpack.c.l.b16 %v490
        %v1045 = vunpack.c.h.b16 %v490
        %v1046 = vunpack.c.l.b16 %v491
        %v1047 = vunpack.c.h.b16 %v491
        %v1048 = vunpack.c.l.b16 %v492
        %v1049 = vunpack.c.h.b16 %v492
        %v1050 = vunpack.c.l.b16 %v493
        %v1051 = vunpack.c.h.b16 %v493
        %v1052 = vunpack.c.l.b16 %v494
        %v1053 = vunpack.c.h.b16 %v494
        %v1054 = vunpack.c.l.b16 %v495
        %v1055 = vunpack.c.h.b16 %v495
        %v1056 = vunpack.c.l.b16 %v496
        %v1057 = vunpack.c.h.b16 %v496
        %v1058 = vunpack.c.l.b16 %v497
        %v1059 = vunpack.c.h.b16 %v497
        %v1060 = vunpack.c.l.b16 %v498
        %v1061 = vunpack.c.h.b16 %v498
        %v1062 = vunpack.c.l.b16 %v499
        %v1063 = vunpack.c.h.b16 %v499
        %v1064 = vunpack.c.l.b16 %v500
        %v1065 = vunpack.c.h.b16 %v500
        %v1066 = vunpack.c.l.b16 %v501
        %v1067 = vunpack.c.h.b16 %v501
        %v1068 = vunpack.c.l.b16 %v502
        %v1069 = vunpack.c.h.b16 %v502
        %v1070 = vunpack.c.l.b16 %v503
        %v1071 = vunpack.c.h.b16 %v503
        %v1072 = vunpack.c.l.b16 %v504
        %v1073 = vunpack.c.h.b16 %v504
        %v1074 = vunpack.c.l.b16 %v505
        %v1075 = vunpack.c.h.b16 %v505
        %v1076 = vunpack.c.l.b16 %v506
        %v1077 = vunpack.c.h.b16 %v506
        %v1078 = vunpack.c.l.b16 %v507
        %v1079 = vunpack.c.h.b16 %v507
        %v1080 = vunpack.c.l.b16 %v508
        %v1081 = vunpack.c.h.b16 %v508
        %v1082 = vunpack.c.l.b16 %v509
        %v1083 = vunpack.c.h.b16 %v509
        %v1084 = vunpack.c.l.b16 %v510
        %v1085 = vunpack.c.h.b16 %v510
        %v1086 = vunpack.c.l.b16 %v511
        %v1087 = vunpack.c.h.b16 %v511
        %v1088 = vunpack.c.l.b16 %v512
        %v1089 = vunpack.c.h.b16 %v512
        %v1090 = vunpack.c.l.b16 %v513
        %v1091 = vunpack.c.h.b16 %v513
        %v1092 = vunpack.c.l.b16 %v514
        %v1093 = vunpack.c.h.b16 %v514
        %v1094 = vunpack.c.l.b16 %v515
        %v1095 = vunpack.c.h.b16 %v515
        %v1096 = vunpack.c.l.b16 %v516
        %v1097 = vunpack.c.h.b16 %v516
        %v1098 = vunpack.c.l.b16 %v517
        %v1099 = vunpack.c.h.b16 %v517
        %v1100 = vunpack.c.l.b16 %v518
        %v1101 = vunpack.c.h.b16 %v518
        %v1102 = vunpack.c.l.b16 %v519
        %v1103 = vunpack.c.h.b16 %v519
        %v1104 = vunpack.c.l.b16 %v520
        %v1105 = vunpack.c.h.b16 %v520
        %v1106 = vunpack.c.l.b16 %v521
        %v1107 = vunpack.c.h.b16 %v521
        %v1108 = vunpack.c.l.b16 %v522
        %v1109 = vunpack.c.h.b16 %v522
        %v1110 = vunpack.c.l.b16 %v523
        %v1111 = vunpack.c.h.b16 %v523
        %v1112 = vunpack.c.l.b16 %v524
        %v1113 = vunpack.c.h.b16 %v524
        %v1114 = vunpack.c.l.b16 %v525
        %v1115 = vunpack.c.h.b16 %v525
        %v1116 = vunpack.c.l.b16 %v526
        %v1117 = vunpack.c.h.b16 %v526
        %v1118 = vunpack.c.l.b16 %v527
        %v1119 = vunpack.c.h.b16 %v527
        %v1120 = vunpack.c.l.b16 %v528
        %v1121 = vunpack.c.h.b16 %v528
        %v1122 = vunpack.c.l.b16 %v529
        %v1123 = vunpack.c.h.b16 %v529
        %v1124 = vunpack.c.l.b16 %v530
        %v1125 = vunpack.c.h.b16 %v530
        %v1126 = vunpack.c.l.b16 %v531
        %v1127 = vunpack.c.h.b16 %v531
        %v1128 = vunpack.c.l.b16 %v532
        %v1129 = vunpack.c.h.b16 %v532
        %v1130 = vunpack.c.l.b16 %v533
        %v1131 = vunpack.c.h.b16 %v533
        %v1132 = vunpack.c.l.b16 %v534
        %v1133 = vunpack.c.h.b16 %v534
        %v1134 = vunpack.c.l.b16 %v535
        %v1135 = vunpack.c.h.b16 %v535
        %v1136 = vunpack.c.l.b16 %v536
        %v1137 = vunpack.c.h.b16 %v536
        %v1138 = vunpack.c.l.b16 %v537
        %v1139 = vunpack.c.h.b16 %v537
        %v1140 = vunpack.c.l.b16 %v538
        %v1141 = vunpack.c.h.b16 %v538
        %v1142 = vunpack.c.l.b16 %v539
        %v1143 = vunpack.c.h.b16 %v539
        %v1144 = vunpack.c.l.b16 %v540
        %v1145 = vunpack.c.h.b16 %v540
        %v1146 = vunpack.c.l.b16 %v541
        %v1147 = vunpack.c.h.b16 %v541
        %v1148 = vunpack.c.l.b16 %v542
        %v1149 = vunpack.c.h.b16 %v542
        %v1150 = vunpack.c.l.b16 %v543
        %v1151 = vunpack.c.h.b16 %v543
        %v1152 = vunpack.c.l.b16 %v544
        %v1153 = vunpack.c.h.b16 %v544
        %v1154 = vunpack.c.l.b16 %v545
        %v1155 = vunpack.c.h.b16 %v545
        %v1156 = vunpack.c.l.b16 %v546
        %v1157 = vunpack.c.h.b16 %v546
        %v1158 = vunpack.c.l.b16 %v547
        %v1159 = vunpack.c.h.b16 %v547
        %v1160 = vunpack.c.l.b16 %v548
        %v1161 = vunpack.c.h.b16 %v548
        %v1162 = vunpack.c.l.b16 %v549
        %v1163 = vunpack.c.h.b16 %v549
        %v1164 = vunpack.c.l.b16 %v550
        %v1165 = vunpack.c.h.b16 %v550
        %v1166 = vunpack.c.l.b16 %v551
        %v1167 = vunpack.c.h.b16 %v551
        %v1168 = vunpack.c.l.b16 %v552
        %v1169 = vunpack.c.h.b16 %v552
        %v1170 = vunpack.c.l.b16 %v553
        %v1171 = vunpack.c.h.b16 %v553
        %v1172 = vunpack.c.l.b16 %v554
        %v1173 = vunpack.c.h.b16 %v554
        %v1174 = vunpack.c.l.b16 %v555
        %v1175 = vunpack.c.h.b16 %v555
        %v1176 = vunpack.c.l.b16 %v556
        %v1177 = vunpack.c.h.b16 %v556
        %v1178 = vunpack.c.l.b16 %v557
        %v1179 = vunpack.c.h.b16 %v557
        %v1180 = vunpack.c.l.b16 %v558
        %v1181 = vunpack.c.h.b16 %v558
        %v1182 = vunpack.c.l.b16 %v559
        %v1183 = vunpack.c.h.b16 %v559
        %v1184 = vunpack.c.l.b16 %v560
        %v1185 = vunpack.c.h.b16 %v560
        %v1186 = vunpack.c.l.b16 %v561
        %v1187 = vunpack.c.h.b16 %v561
        %v1188 = vunpack.c.l.b16 %v562
        %v1189 = vunpack.c.h.b16 %v562
        %v1190 = vunpack.c.l.b16 %v563
        %v1191 = vunpack.c.h.b16 %v563
        %v1192 = vunpack.c.l.b16 %v564
        %v1193 = vunpack.c.h.b16 %v564
        %v1194 = vunpack.c.l.b16 %v565
        %v1195 = vunpack.c.h.b16 %v565
        %v1196 = vunpack.c.l.b16 %v566
        %v1197 = vunpack.c.h.b16 %v566
        %v1198 = vunpack.c.l.b16 %v567
        %v1199 = vunpack.c.h.b16 %v567
        %v1200 = vunpack.c.l.b16 %v568
        %v1201 = vunpack.c.h.b16 %v568
        %v1202 = vunpack.c.l.b16 %v569
        %v1203 = vunpack.c.h.b16 %v569
        %v1204 = vunpack.c.l.b16 %v570
        %v1205 = vunpack.c.h.b16 %v570
        %v1206 = vunpack.c.l.b16 %v571
        %v1207 = vunpack.c.h.b16 %v571
        %v1208 = vunpack.c.l.b16 %v572
        %v1209 = vunpack.c.h.b16 %v572
        %v1210 = vunpack.c.l.b16 %v573
        %v1211 = vunpack.c.h.b16 %v573
        %v1212 = vunpack.c.l.b16 %v574
        %v1213 = vunpack.c.h.b16 %v574
        %v1214 = vunpack.c.l.b16 %v575
        %v1215 = vunpack.c.h.b16 %v575
        %v1216 = vunpack.c.l.b16 %v576
        %v1217 = vunpack.c.h.b16 %v576
        %v1218 = vunpack.c.l.b16 %v577
        %v1219 = vunpack.c.h.b16 %v577
        %v1220 = vunpack.c.l.b16 %v578
        %v1221 = vunpack.c.h.b16 %v578
        %v1222 = vunpack.c.l.b16 %v579
        %v1223 = vunpack.c.h.b16 %v579
        %v1224 = vunpack.c.l.b16 %v580
        %v1225 = vunpack.c.h.b16 %v580
        %v1226 = vunpack.c.l.b16 %v581
        %v1227 = vunpack.c.h.b16 %v581
        %v1228 = vunpack.c.l.b16 %v582
        %v1229 = vunpack.c.h.b16 %v582
        %v1230 = vunpack.c.l.b16 %v583
        %v1231 = vunpack.c.h.b16 %v583
        %v1232 = vunpack.c.l.b16 %v584
        %v1233 = vunpack.c.h.b16 %v584
        %v1234 = vunpack.c.l.b16 %v585
        %v1235 = vunpack.c.h.b16 %v585
        %v1236 = vunpack.c.l.b16 %v586
        %v1237 = vunpack.c.h.b16 %v586
        %v1238 = vunpack.c.l.b16 %v587
        %v1239 = vunpack.c.h.b16 %v587
        %v1240 = vunpack.c.l.b16 %v588
        %v1241 = vunpack.c.h.b16 %v588
        %v1242 = vunpack.c.l.b16 %v589
        %v1243 = vunpack.c.h.b16 %v589
        %v1244 = vunpack.c.l.b16 %v590
        %v1245 = vunpack.c.h.b16 %v590
        %v1246 = vunpack.c.l.b16 %v591
        %v1247 = vunpack.c.h.b16 %v591
        %v1248 = vunpack.c.l.b16 %v592
        %v1249 = vunpack.c.h.b16 %v592
        %v1250 = vunpack.c.l.b16 %v593
        %v1251 = vunpack.c.h.b16 %v593
        %v1252 = vunpack.c.l.b16 %v594
        %v1253 = vunpack.c.h.b16 %v594
        %v1254 = vunpack.c.l.b16 %v595
        %v1255 = vunpack.c.h.b16 %v595
        %v1256 = vunpack.c.l.b16 %v596
        %v1257 = vunpack.c.h.b16 %v596
        %v1258 = vunpack.c.l.b16 %v597
        %v1259 = vunpack.c.h.b16 %v597
        %v1260 = vunpack.c.l.b16 %v598
        %v1261 = vunpack.c.h.b16 %v598
        %v1262 = vunpack.c.l.b16 %v599
        %v1263 = vunpack.c.h.b16 %v599
        %v1264 = vunpack.c.l.b16 %v600
        %v1265 = vunpack.c.h.b16 %v600
        %v1266 = vunpack.c.l.b16 %v601
        %v1267 = vunpack.c.h.b16 %v601
        %v1268 = vunpack.c.l.b16 %v602
        %v1269 = vunpack.c.h.b16 %v602
        %v1270 = vunpack.c.l.b16 %v603
        %v1271 = vunpack.c.h.b16 %v603
        %v1272 = vunpack.c.l.b16 %v604
        %v1273 = vunpack.c.h.b16 %v604
        %v1274 = vunpack.c.l.b16 %v605
        %v1275 = vunpack.c.h.b16 %v605
        %v1276 = vunpack.c.l.b16 %v606
        %v1277 = vunpack.c.h.b16 %v606
        %v1278 = vunpack.c.l.b16 %v607
        %v1279 = vunpack.c.h.b16 %v607
        %v1280 = vunpack.c.l.b16 %v608
        %v1281 = vunpack.c.h.b16 %v608
        %v1282 = vunpack.c.l.b16 %v609
        %v1283 = vunpack.c.h.b16 %v609
        %v1284 = vunpack.c.l.b16 %v610
        %v1285 = vunpack.c.h.b16 %v610
        %v1286 = vunpack.c.l.b16 %v611
        %v1287 = vunpack.c.h.b16 %v611
        %v1288 = vunpack.c.l.b16 %v612
        %v1289 = vunpack.c.h.b16 %v612
        %v1290 = vunpack.c.l.b16 %v613
        %v1291 = vunpack.c.h.b16 %v613
        %v1292 = vunpack.c.l.b16 %v614
        %v1293 = vunpack.c.h.b16 %v614
        %v1294 = vunpack.c.l.b16 %v615
        %v1295 = vunpack.c.h.b16 %v615
        %v1296 = vunpack.c.l.b16 %v616
        %v1297 = vunpack.c.h.b16 %v616
        %v1298 = vunpack.c.l.b16 %v617
        %v1299 = vunpack.c.h.b16 %v617
        %v1300 = vunpack.c.l.b16 %v618
        %v1301 = vunpack.c.h.b16 %v618
        %v1302 = vunpack.c.l.b16 %v619
        %v1303 = vunpack.c.h.b16 %v619
        %v1304 = vunpack.c.l.b16 %v620
        %v1305 = vunpack.c.h.b16 %v620
        %v1306 = vunpack.c.l.b16 %v621
        %v1307 = vunpack.c.h.b16 %v621
        %v1308 = vunpack.c.l.b16 %v622
        %v1309 = vunpack.c.h.b16 %v622
        %v1310 = vunpack.c.l.b16 %v623
        %v1311 = vunpack.c.h.b16 %v623
        %v1312 = vunpack.c.l.b16 %v624
        %v1313 = vunpack.c.h.b16 %v624
        %v1314 = vunpack.c.l.b16 %v625
        %v1315 = vunpack.c.h.b16 %v625
        %v1316 = vunpack.c.l.b16 %v626
        %v1317 = vunpack.c.h.b16 %v626
        %v1318 = vunpack.c.l.b16 %v627
        %v1319 = vunpack.c.h.b16 %v627
        %v1320 = vunpack.c.l.b16 %v628
        %v1321 = vunpack.c.h.b16 %v628
        %v1322 = vunpack.c.l.b16 %v629
        %v1323 = vunpack.c.h.b16 %v629
        %v1324 = vunpack.c.l.b16 %v630
        %v1325 = vunpack.c.h.b16 %v630
        %v1326 = vunpack.c.l.b16 %v631
        %v1327 = vunpack.c.h.b16 %v631
        %v1328 = vunpack.c.l.b16 %v632
        %v1329 = vunpack.c.h.b16 %v632
        %v1330 = vunpack.c.l.b16 %v633
        %v1331 = vunpack.c.h.b16 %v633
        %v1332 = vunpack.c.l.b16 %v634
        %v1333 = vunpack.c.h.b16 %v634
        %v1334 = vunpack.c.l.b16 %v635
        %v1335 = vunpack.c.h.b16 %v635
        %v1336 = vunpack.c.l.b16 %v636
        %v1337 = vunpack.c.h.b16 %v636
        %v1338 = vunpack.c.l.b16 %v637
        %v1339 = vunpack.c.h.b16 %v637
        %v1340 = vunpack.c.l.b16 %v638
        %v1341 = vunpack.c.h.b16 %v638
        %v1342 = vunpack.c.l.b16 %v639
        %v1343 = vunpack.c.h.b16 %v639
        %v1344 = vunpack.c.l.b16 %v640
        %v1345 = vunpack.c.h.b16 %v640
        %v1346 = vunpack.c.l.b16 %v641
        %v1347 = vunpack.c.h.b16 %v641
        %v1348 = vunpack.c.l.b16 %v642
        %v1349 = vunpack.c.h.b16 %v642
        %v1350 = vunpack.c.l.b16 %v643
        %v1351 = vunpack.c.h.b16 %v643
        %v1352 = vunpack.c.l.b16 %v644
        %v1353 = vunpack.c.h.b16 %v644
        %v1354 = vunpack.c.l.b16 %v645
        %v1355 = vunpack.c.h.b16 %v645
        %v1356 = vunpack.c.l.b16 %v646
        %v1357 = vunpack.c.h.b16 %v646
        %v1358 = vpack.c.b16 %v970, %v966
        %v1359 = vpack.c.b16 %v971, %v967
        %v1360 = vpack.c.b16 %v972, %v968
        %v1361 = vpack.c.b16 %v973, %v969
        %v1362 = vpack.c.b16 %v978, %v974
        %v1363 = vpack.c.b16 %v979, %v975
        %v1364 = vpack.c.b16 %v980, %v976
        %v1365 = vpack.c.b16 %v981, %v977
        %v1366 = vpack.c.b16 %v986, %v982
        %v1367 = vpack.c.b16 %v987, %v983
        %v1368 = vpack.c.b16 %v988, %v984
        %v1369 = vpack.c.b16 %v989, %v985
        %v1370 = vpack.c.b16 %v994, %v990
        %v1371 = vpack.c.b16 %v995, %v991
        %v1372 = vpack.c.b16 %v996, %v992
        %v1373 = vpack.c.b16 %v997, %v993
        %v1374 = vpack.c.b16 %v1002, %v998
        %v1375 = vpack.c.b16 %v1003, %v999
        %v1376 = vpack.c.b16 %v1004, %v1000
        %v1377 = vpack.c.b16 %v1005, %v1001
        %v1378 = vpack.c.b16 %v1010, %v1006
        %v1379 = vpack.c.b16 %v1011, %v1007
        %v1380 = vpack.c.b16 %v1012, %v1008
        %v1381 = vpack.c.b16 %v1013, %v1009
        %v1382 = vpack.c.b16 %v1018, %v1014
        %v1383 = vpack.c.b16 %v1019, %v1015
        %v1384 = vpack.c.b16 %v1020, %v1016
        %v1385 = vpack.c.b16 %v1021, %v1017
        %v1386 = vpack.c.b16 %v1026, %v1022
        %v1387 = vpack.c.b16 %v1027, %v1023
        %v1388 = vpack.c.b16 %v1028, %v1024
        %v1389 = vpack.c.b16 %v1029, %v1025
        %v1390 = vpack.c.b16 %v1034, %v1030
        %v1391 = vpack.c.b16 %v1035, %v1031
        %v1392 = vpack.c.b16 %v1036, %v1032
        %v1393 = vpack.c.b16 %v1037, %v1033
        %v1394 = vpack.c.b16 %v1042, %v1038
        %v1395 = vpack.c.b16 %v1043, %v1039
        %v1396 = vpack.c.b16 %v1044, %v1040
        %v1397 = vpack.c.b16 %v1045, %v1041
        %v1398 = vpack.c.b16 %v1050, %v1046
        %v1399 = vpack.c.b16 %v1051, %v1047
        %v1400 = vpack.c.b16 %v1052, %v1048
        %v1401 = vpack.c.b16 %v1053, %v1049
        %v1402 = vpack.c.b16 %v1058, %v1054
        %v1403 = vpack.c.b16 %v1059, %v1055
        %v1404 = vpack.c.b16 %v1060, %v1056
        %v1405 = vpack.c.b16 %v1061, %v1057
        %v1406 = vpack.c.b16 %v1066, %v1062
        %v1407 = vpack.c.b16 %v1067, %v1063
        %v1408 = vpack.c.b16 %v1068, %v1064
        %v1409 = vpack.c.b16 %v1069, %v1065
        %v1410 = vpack.c.b16 %v1074, %v1070
        %v1411 = vpack.c.b16 %v1075, %v1071
        %v1412 = vpack.c.b16 %v1076, %v1072
        %v1413 = vpack.c.b16 %v1077, %v1073
        %v1414 = vpack.c.b16 %v1082, %v1078
        %v1415 = vpack.c.b16 %v1083, %v1079
        %v1416 = vpack.c.b16 %v1084, %v1080
        %v1417 = vpack.c.b16 %v1085, %v1081
        %v1418 = vpack.c.b16 %v1090, %v1086
        %v1419 = vpack.c.b16 %v1091, %v1087
        %v1420 = vpack.c.b16 %v1092, %v1088
        %v1421 = vpack.c.b16 %v1093, %v1089
        %v1422 = vpack.c.b16 %v1098, %v1094
        %v1423 = vpack.c.b16 %v1099, %v1095
        %v1424 = vpack.c.b16 %v1100, %v1096
        %v1425 = vpack.c.b16 %v1101, %v1097
        %v1426 = vpack.c.b16 %v1106, %v1102
        %v1427 = vpack.c.b16 %v1107, %v1103
        %v1428 = vpack.c.b16 %v1108, %v1104
        %v1429 = vpack.c.b16 %v1109, %v1105
        %v1430 = vpack.c.b16 %v1114, %v1110
        %v1431 = vpack.c.b16 %v1115, %v1111
        %v1432 = vpack.c.b16 %v1116, %v1112
        %v1433 = vpack.c.b16 %v1117, %v1113
        %v1434 = vpack.c.b16 %v1122, %v1118
        %v1435 = vpack.c.b16 %v1123, %v1119
        %v1436 = vpack.c.b16 %v1124, %v1120
        %v1437 = vpack.c.b16 %v1125, %v1121
        %v1438 = vpack.c.b16 %v1130, %v1126
        %v1439 = vpack.c.b16 %v1131, %v1127
        %v1440 = vpack.c.b16 %v1132, %v1128
        %v1441 = vpack.c.b16 %v1133, %v1129
        %v1442 = vpack.c.b16 %v1138, %v1134
        %v1443 = vpack.c.b16 %v1139, %v1135
        %v1444 = vpack.c.b16 %v1140, %v1136
        %v1445 = vpack.c.b16 %v1141, %v1137
        %v1446 = vpack.c.b16 %v1146, %v1142
        %v1447 = vpack.c.b16 %v1147, %v1143
        %v1448 = vpack.c.b16 %v1148, %v1144
        %v1449 = vpack.c.b16 %v1149, %v1145
        %v1450 = vpack.c.b16 %v1154, %v1150
        %v1451 = vpack.c.b16 %v1155, %v1151
        %v1452 = vpack.c.b16 %v1156, %v1152
        %v1453 = vpack.c.b16 %v1157, %v1153
        %v1454 = vpack.c.b16 %v1162, %v1158
        %v1455 = vpack.c.b16 %v1163, %v1159
        %v1456 = vpack.c.b16 %v1164, %v1160
        %v1457 = vpack.c.b16 %v1165, %v1161
        %v1458 = vpack.c.b16 %v1170, %v1166
        %v1459 = vpack.c.b16 %v1171, %v1167
        %v1460 = vpack.c.b16 %v1172, %v1168
        %v1461 = vpack.c.b16 %v1173, %v1169
        %v1462 = vpack.c.b16 %v1178, %v1174
        %v1463 = vpack.c.b16 %v1179, %v1175
        %v1464 = vpack.c.b16 %v1180, %v1176
        %v1465 = vpack.c.b16 %v1181, %v1177
        %v1466 = vpack.c.b16 %v1186, %v1182
        %v1467 = vpack.c.b16 %v1187, %v1183
        %v1468 = vpack.c.b16 %v1188, %v1184
        %v1469 = vpack.c.b16 %v1189, %v1185
        %v1470 = vpack.c.b16 %v1194, %v1190
        %v1471 = vpack.c.b16 %v1195, %v1191
        %v1472 = vpack.c.b16 %v1196, %v1192
        %v1473 = vpack.c.b16 %v1197, %v1193
        %v1474 = vpack.c.b16 %v1202, %v1198
        %v1475 = vpack.c.b16 %v1203, %v1199
        %v1476 = vpack.c.b16 %v1204, %v1200
        %v1477 = vpack.c.b16 %v1205, %v1201
        %v1478 = vpack.c.b16 %v1210, %v1206
        %v1479 = vpack.c.b16 %v1211, %v1207
        %v1480 = vpack.c.b16 %v1212, %v1208
        %v1481 = vpack.c.b16 %v1213, %v1209
        %v1482 = vpack.c.b16 %v1218, %v1214
        %v1483 = vpack.c.b16 %v1219, %v1215
        %v1484 = vpack.c.b16 %v1220, %v1216
        %v1485 = vpack.c.b16 %v1221, %v1217
        %v1486 = vpack.c.b16 %v1226, %v1222
        %v1487 = vpack.c.b16 %v1227, %v1223
        %v1488 = vpack.c.b16 %v1228, %v1224
        %v1489 = vpack.c.b16 %v1229, %v1225
        %v1490 = vpack.c.b16 %v1234, %v1230
        %v1491 = vpack.c.b16 %v1235, %v1231
        %v1492 = vpack.c.b16 %v1236, %v1232
        %v1493 = vpack.c.b16 %v1237, %v1233
        %v1494 = vpack.c.b16 %v1242, %v1238
        %v1495 = vpack.c.b16 %v1243, %v1239
        %v1496 = vpack.c.b16 %v1244, %v1240
        %v1497 = vpack.c.b16 %v1245, %v1241
        %v1498 = vpack.c.b16 %v1250, %v1246
        %v1499 = vpack.c.b16 %v1251, %v1247
        %v1500 = vpack.c.b16 %v1252, %v1248
        %v1501 = vpack.c.b16 %v1253, %v1249
        %v1502 = vpack.c.b16 %v1258, %v1254
        %v1503 = vpack.c.b16 %v1259, %v1255
        %v1504 = vpack.c.b16 %v1260, %v1256
        %v1505 = vpack.c.b16 %v1261, %v1257
        %v1506 = vpack.c.b16 %v1266, %v1262
        %v1507 = vpack.c.b16 %v1267, %v1263
        %v1508 = vpack.c.b16 %v1268, %v1264
        %v1509 = vpack.c.b16 %v1269, %v1265
        %v1510 = vpack.c.b16 %v1274, %v1270
        %v1511 = vpack.c.b16 %v1275, %v1271
        %v1512 = vpack.c.b16 %v1276, %v1272
        %v1513 = vpack.c.b16 %v1277, %v1273
        %v1514 = vpack.c.b16 %v1282, %v1278
        %v1515 = vpack.c.b16 %v1283, %v1279
        %v1516 = vpack.c.b16 %v1284, %v1280
        %v1517 = vpack.c.b16 %v1285, %v1281
        %v1518 = vpack.c.b16 %v1290, %v1286
        %v1519 = vpack.c.b16 %v1291, %v1287
        %v1520 = vpack.c.b16 %v1292, %v1288
        %v1521 = vpack.c.b16 %v1293, %v1289
        %v1522 = vpack.c.b16 %v1298, %v1294
        %v1523 = vpack.c.b16 %v1299, %v1295
        %v1524 = vpack.c.b16 %v1300, %v1296
        %v1525 = vpack.c.b16 %v1301, %v1297
        %v1526 = vpack.c.b16 %v1306, %v1302
        %v1527 = vpack.c.b16 %v1307, %v1303
        %v1528 = vpack.c.b16 %v1308, %v1304
        %v1529 = vpack.c.b16 %v1309, %v1305
        %v1530 = vpack.c.b16 %v1314, %v1310
        %v1531 = vpack.c.b16 %v1315, %v1311
        %v1532 = vpack.c.b16 %v1316, %v1312
        %v1533 = vpack.c.b16 %v1317, %v1313
        %v1534 = vpack.c.b16 %v1322, %v1318
        %v1535 = vpack.c.b16 %v1323, %v1319
        %v1536 = vpack.c.b16 %v1324, %v1320
        %v1537 = vpack.c.b16 %v1325, %v1321
        %v1538 = vpack.c.b16 %v1330, %v1326
        %v1539 = vpack.c.b16 %v1331, %v1327
        %v1540 = vpack.c.b16 %v1332, %v1328
        %v1541 = vpack.c.b16 %v1333, %v1329
        %v1542 = vpack.c.b16 %v1338, %v1334
        %v1543 = vpack.c.b16 %v1339, %v1335
        %v1544 = vpack.c.b16 %v1340, %v1336
        %v1545 = vpack.c.b16 %v1341, %v1337
        %v1546 = vpack.c.b16 %v1346, %v1342
        %v1547 = vpack.c.b16 %v1347, %v1343
        %v1548 = vpack.c.b16 %v1348, %v1344
        %v1549 = vpack.c.b16 %v1349, %v1345
        %v1550 = vpack.c.b16 %v1354, %v1350
        %v1551 = vpack.c.b16 %v1355, %v1351
        %v1552 = vpack.c.b16 %v1356, %v1352
        %v1553 = vpack.c.b16 %v1357, %v1353
        %vm1750 = vcmask 130048
        %v1752 = vsel %vm1750, %v433, 0
        %1754 = vmatprep.subr.bf16.mxu0 %v1359
        %1755 = vmatpush1.bf16.msra.mxu0 %v1358
        %1756 = vmatprep.subr.bf16.mxu0 %v1363
        %1757 = vmatpush1.bf16.msra.mxu0 %v1362
        %1758 = vmatprep.subr.bf16.mxu0 %v1367
        %1759 = vmatpush1.bf16.msra.mxu0 %v1366
        %1760 = vmatprep.subr.bf16.mxu0 %v1371
        %1761 = vmatpush1.bf16.msra.mxu0 %v1370
        %1762 = vmatprep.subr.bf16.mxu0 %v1375
        %1763 = vmatpush1.bf16.msra.mxu0 %v1374
        %1764 = vmatprep.subr.bf16.mxu0 %v1379
        %1765 = vmatpush1.bf16.msra.mxu0 %v1378
        %1766 = vmatprep.subr.bf16.mxu0 %v1383
        %1767 = vmatpush1.bf16.msra.mxu0 %v1382
        %1768 = vmatprep.subr.bf16.mxu0 %v1387
        %1769 = vmatpush1.bf16.msra.mxu0 %v1386
        %1770 = vmatprep.subr.bf16.mxu0 %v1391
        %1771 = vmatpush1.bf16.msra.mxu0 %v1390
        %1772 = vmatprep.subr.bf16.mxu0 %v1395
        %1773 = vmatpush1.bf16.msra.mxu0 %v1394
        %1774 = vmatprep.subr.bf16.mxu0 %v1399
        %1775 = vmatpush1.bf16.msra.mxu0 %v1398
        %1776 = vmatprep.subr.bf16.mxu0 %v1403
        %1777 = vmatpush1.bf16.msra.mxu0 %v1402
        %1778 = vmatprep.subr.bf16.mxu0 %v1407
        %1779 = vmatpush1.bf16.msra.mxu0 %v1406
        %1780 = vmatprep.subr.bf16.mxu0 %v1411
        %1781 = vmatpush1.bf16.msra.mxu0 %v1410
        %1782 = vmatprep.subr.bf16.mxu0 %v1415
        %1783 = vmatpush1.bf16.msra.mxu0 %v1414
        %1784 = vmatprep.subr.bf16.mxu0 %v1419
        %1785 = vmatpush1.bf16.msra.mxu0 %v1418
        %1786 = vmatprep.mubr.bf16.mxu0 %v428
        %1787 = vmatmul.mubr.bf16.gmra.mrb[0].mxu0 %v427
        %v1788 = vpop.f32.mrb[0].mxu0
        %v1789 = vadd.f32 %v719, %v1788
        %v1790 = vpop.f32.mrb[0].mxu0
        %v1791 = vadd.f32 %v721, %v1790
        %v1792 = vpop.f32.mrb[0].mxu0
        %v1793 = vadd.f32 %v723, %v1792
        %v1794 = vpop.f32.mrb[0].mxu0
        %v1795 = vadd.f32 %v725, %v1794
        %1796 = vdwg.mxu0
        %1797 = vmatprep.subr.bf16.mxu0 %v1423
        %1798 = vmatpush1.bf16.msra.mxu0 %v1422
        %1799 = vmatprep.subr.bf16.mxu0 %v1427
        %1800 = vmatpush1.bf16.msra.mxu0 %v1426
        %1801 = vmatprep.subr.bf16.mxu0 %v1431
        %1802 = vmatpush1.bf16.msra.mxu0 %v1430
        %1803 = vmatprep.subr.bf16.mxu0 %v1435
        %1804 = vmatpush1.bf16.msra.mxu0 %v1434
        %1805 = vmatprep.subr.bf16.mxu0 %v1439
        %1806 = vmatpush1.bf16.msra.mxu0 %v1438
        %1807 = vmatprep.subr.bf16.mxu0 %v1443
        %1808 = vmatpush1.bf16.msra.mxu0 %v1442
        %1809 = vmatprep.subr.bf16.mxu0 %v1447
        %1810 = vmatpush1.bf16.msra.mxu0 %v1446
        %1811 = vmatprep.subr.bf16.mxu0 %v1451
        %1812 = vmatpush1.bf16.msra.mxu0 %v1450
        %1813 = vmatprep.subr.bf16.mxu0 %v1455
        %1814 = vmatpush1.bf16.msra.mxu0 %v1454
        %1815 = vmatprep.subr.bf16.mxu0 %v1459
        %1816 = vmatpush1.bf16.msra.mxu0 %v1458
        %1817 = vmatprep.subr.bf16.mxu0 %v1463
        %1818 = vmatpush1.bf16.msra.mxu0 %v1462
        %1819 = vmatprep.subr.bf16.mxu0 %v1467
        %1820 = vmatpush1.bf16.msra.mxu0 %v1466
        %1821 = vmatprep.subr.bf16.mxu0 %v1471
        %1822 = vmatpush1.bf16.msra.mxu0 %v1470
        %1823 = vmatprep.subr.bf16.mxu0 %v1475
        %1824 = vmatpush1.bf16.msra.mxu0 %v1474
        %1825 = vmatprep.subr.bf16.mxu0 %v1479
        %1826 = vmatpush1.bf16.msra.mxu0 %v1478
        %1827 = vmatprep.subr.bf16.mxu0 %v1483
        %1828 = vmatpush1.bf16.msra.mxu0 %v1482
        %1829 = vmatprep.mubr.bf16.mxu0 %v430
        %1830 = vmatmul.mubr.bf16.gmra.mrb[0].mxu0 %v429
        %v1831 = vpop.f32.mrb[0].mxu0
        %v1832 = vadd.f32 %v1789, %v1831
        %v1833 = vpop.f32.mrb[0].mxu0
        %v1834 = vadd.f32 %v1791, %v1833
        %v1835 = vpop.f32.mrb[0].mxu0
        %v1836 = vadd.f32 %v1793, %v1835
        %v1837 = vpop.f32.mrb[0].mxu0
        %v1838 = vadd.f32 %v1795, %v1837
        %1839 = vdwg.mxu0
        %1840 = vmatprep.subr.bf16.mxu0 %v1487
        %1841 = vmatpush1.bf16.msra.mxu0 %v1486
        %1842 = vmatprep.subr.bf16.mxu0 %v1491
        %1843 = vmatpush1.bf16.msra.mxu0 %v1490
        %1844 = vmatprep.subr.bf16.mxu0 %v1495
        %1845 = vmatpush1.bf16.msra.mxu0 %v1494
        %1846 = vmatprep.subr.bf16.mxu0 %v1499
        %1847 = vmatpush1.bf16.msra.mxu0 %v1498
        %1848 = vmatprep.subr.bf16.mxu0 %v1503
        %1849 = vmatpush1.bf16.msra.mxu0 %v1502
        %1850 = vmatprep.subr.bf16.mxu0 %v1507
        %1851 = vmatpush1.bf16.msra.mxu0 %v1506
        %1852 = vmatprep.subr.bf16.mxu0 %v1511
        %1853 = vmatpush1.bf16.msra.mxu0 %v1510
        %1854 = vmatprep.subr.bf16.mxu0 %v1515
        %1855 = vmatpush1.bf16.msra.mxu0 %v1514
        %1856 = vmatprep.subr.bf16.mxu0 %v1519
        %1857 = vmatpush1.bf16.msra.mxu0 %v1518
        %1858 = vmatprep.subr.bf16.mxu0 %v1523
        %1859 = vmatpush1.bf16.msra.mxu0 %v1522
        %1860 = vmatprep.subr.bf16.mxu0 %v1527
        %1861 = vmatpush1.bf16.msra.mxu0 %v1526
        %1862 = vmatprep.subr.bf16.mxu0 %v1531
        %1863 = vmatpush1.bf16.msra.mxu0 %v1530
        %1864 = vmatprep.subr.bf16.mxu0 %v1535
        %1865 = vmatpush1.bf16.msra.mxu0 %v1534
        %1866 = vmatprep.subr.bf16.mxu0 %v1539
        %1867 = vmatpush1.bf16.msra.mxu0 %v1538
        %1868 = vmatprep.subr.bf16.mxu0 %v1543
        %1869 = vmatpush1.bf16.msra.mxu0 %v1542
        %1870 = vmatprep.subr.bf16.mxu0 %v1547
        %1871 = vmatpush1.bf16.msra.mxu0 %v1546
        %1872 = vmatprep.mubr.bf16.mxu0 %v432
        %1873 = vmatmul.mubr.bf16.gmra.mrb[0].mxu0 %v431
        %v1874 = vpop.f32.mrb[0].mxu0
        %v1875 = vadd.f32 %v1832, %v1874
        %v1876 = vpop.f32.mrb[0].mxu0
        %v1877 = vadd.f32 %v1834, %v1876
        %v1878 = vpop.f32.mrb[0].mxu0
        %v1879 = vadd.f32 %v1836, %v1878
        %v1880 = vpop.f32.mrb[0].mxu0
        %v1881 = vadd.f32 %v1838, %v1880
        %1882 = vdwg.mxu0
        %1883 = vmatprep.subr.bf16.mxu0 %v1551
        %1884 = vmatpush1.bf16.msra.mxu0 %v1550
        %1885 = vmatprep.subr.bf16.mxu0 0
        %1886 = vmatpush1.bf16.msra.mxu0 0
        %1887 = vmatprep.subr.bf16.mxu0 0
        %1888 = vmatpush1.bf16.msra.mxu0 0
        %1889 = vmatprep.subr.bf16.mxu0 0
        %1890 = vmatpush1.bf16.msra.mxu0 0
        %1891 = vmatprep.subr.bf16.mxu0 0
        %1892 = vmatpush1.bf16.msra.mxu0 0
        %1893 = vmatprep.subr.bf16.mxu0 0
        %1894 = vmatpush1.bf16.msra.mxu0 0
        %1895 = vmatprep.subr.bf16.mxu0 0
        %1896 = vmatpush1.bf16.msra.mxu0 0
        %1897 = vmatprep.subr.bf16.mxu0 0
        %1898 = vmatpush1.bf16.msra.mxu0 0
        %1899 = vmatprep.subr.bf16.mxu0 0
        %1900 = vmatpush1.bf16.msra.mxu0 0
        %1901 = vmatprep.subr.bf16.mxu0 0
        %1902 = vmatpush1.bf16.msra.mxu0 0
        %1903 = vmatprep.subr.bf16.mxu0 0
        %1904 = vmatpush1.bf16.msra.mxu0 0
        %1905 = vmatprep.subr.bf16.mxu0 0
        %1906 = vmatpush1.bf16.msra.mxu0 0
        %1907 = vmatprep.subr.bf16.mxu0 0
        %1908 = vmatpush1.bf16.msra.mxu0 0
        %1909 = vmatprep.subr.bf16.mxu0 0
        %1910 = vmatpush1.bf16.msra.mxu0 0
        %1911 = vmatprep.subr.bf16.mxu0 0
        %1912 = vmatpush1.bf16.msra.mxu0 0
        %1913 = vmatprep.subr.bf16.mxu0 0
        %1914 = vmatpush1.bf16.msra.mxu0 0
        %1915 = vmatprep.mubr.bf16.mxu0 0
        %1916 = vmatmul.mubr.bf16.gmra.mrb[0].mxu0 %v1752
        %v1917 = vpop.f32.mrb[0].mxu0
        %v1918 = vadd.f32 %v1875, %v1917
        %v1919 = vpop.f32.mrb[0].mxu0
        %v1920 = vadd.f32 %v1877, %v1919
        %v1921 = vpop.f32.mrb[0].mxu0
        %v1922 = vadd.f32 %v1879, %v1921
        %v1923 = vpop.f32.mrb[0].mxu0
        %v1924 = vadd.f32 %v1881, %v1923
        %1925 = vdwg.mxu0
        %1926 = vmatprep.subr.bf16.mxu0 %v1361
        %1927 = vmatpush1.bf16.msra.mxu0 %v1360
        %1928 = vmatprep.subr.bf16.mxu0 %v1365
        %1929 = vmatpush1.bf16.msra.mxu0 %v1364
        %1930 = vmatprep.subr.bf16.mxu0 %v1369
        %1931 = vmatpush1.bf16.msra.mxu0 %v1368
        %1932 = vmatprep.subr.bf16.mxu0 %v1373
        %1933 = vmatpush1.bf16.msra.mxu0 %v1372
        %1934 = vmatprep.subr.bf16.mxu0 %v1377
        %1935 = vmatpush1.bf16.msra.mxu0 %v1376
        %1936 = vmatprep.subr.bf16.mxu0 %v1381
        %1937 = vmatpush1.bf16.msra.mxu0 %v1380
        %1938 = vmatprep.subr.bf16.mxu0 %v1385
        %1939 = vmatpush1.bf16.msra.mxu0 %v1384
        %1940 = vmatprep.subr.bf16.mxu0 %v1389
        %1941 = vmatpush1.bf16.msra.mxu0 %v1388
        %1942 = vmatprep.subr.bf16.mxu0 %v1393
        %1943 = vmatpush1.bf16.msra.mxu0 %v1392
        %1944 = vmatprep.subr.bf16.mxu0 %v1397
        %1945 = vmatpush1.bf16.msra.mxu0 %v1396
        %1946 = vmatprep.subr.bf16.mxu0 %v1401
        %1947 = vmatpush1.bf16.msra.mxu0 %v1400
        %1948 = vmatprep.subr.bf16.mxu0 %v1405
        %1949 = vmatpush1.bf16.msra.mxu0 %v1404
        %1950 = vmatprep.subr.bf16.mxu0 %v1409
        %1951 = vmatpush1.bf16.msra.mxu0 %v1408
        %1952 = vmatprep.subr.bf16.mxu0 %v1413
        %1953 = vmatpush1.bf16.msra.mxu0 %v1412
        %1954 = vmatprep.subr.bf16.mxu0 %v1417
        %1955 = vmatpush1.bf16.msra.mxu0 %v1416
        %1956 = vmatprep.subr.bf16.mxu0 %v1421
        %1957 = vmatpush1.bf16.msra.mxu0 %v1420
        %1958 = vmatprep.mubr.bf16.mxu0 %v428
        %1959 = vmatmul.mubr.bf16.gmra.mrb[0].mxu0 %v427
        %v1960 = vpop.f32.mrb[0].mxu0
        %v1961 = vadd.f32 %v762, %v1960
        %v1962 = vpop.f32.mrb[0].mxu0
        %v1963 = vadd.f32 %v764, %v1962
        %v1964 = vpop.f32.mrb[0].mxu0
        %v1965 = vadd.f32 %v766, %v1964
        %v1966 = vpop.f32.mrb[0].mxu0
        %v1967 = vadd.f32 %v768, %v1966
        %1968 = vdwg.mxu0
        %1969 = vmatprep.subr.bf16.mxu0 %v1425
        %1970 = vmatpush1.bf16.msra.mxu0 %v1424
        %1971 = vmatprep.subr.bf16.mxu0 %v1429
        %1972 = vmatpush1.bf16.msra.mxu0 %v1428
        %1973 = vmatprep.subr.bf16.mxu0 %v1433
        %1974 = vmatpush1.bf16.msra.mxu0 %v1432
        %1975 = vmatprep.subr.bf16.mxu0 %v1437
        %1976 = vmatpush1.bf16.msra.mxu0 %v1436
        %1977 = vmatprep.subr.bf16.mxu0 %v1441
        %1978 = vmatpush1.bf16.msra.mxu0 %v1440
        %1979 = vmatprep.subr.bf16.mxu0 %v1445
        %1980 = vmatpush1.bf16.msra.mxu0 %v1444
        %1981 = vmatprep.subr.bf16.mxu0 %v1449
        %1982 = vmatpush1.bf16.msra.mxu0 %v1448
        %1983 = vmatprep.subr.bf16.mxu0 %v1453
        %1984 = vmatpush1.bf16.msra.mxu0 %v1452
        %1985 = vmatprep.subr.bf16.mxu0 %v1457
        %1986 = vmatpush1.bf16.msra.mxu0 %v1456
        %1987 = vmatprep.subr.bf16.mxu0 %v1461
        %1988 = vmatpush1.bf16.msra.mxu0 %v1460
        %1989 = vmatprep.subr.bf16.mxu0 %v1465
        %1990 = vmatpush1.bf16.msra.mxu0 %v1464
        %1991 = vmatprep.subr.bf16.mxu0 %v1469
        %1992 = vmatpush1.bf16.msra.mxu0 %v1468
        %1993 = vmatprep.subr.bf16.mxu0 %v1473
        %1994 = vmatpush1.bf16.msra.mxu0 %v1472
        %1995 = vmatprep.subr.bf16.mxu0 %v1477
        %1996 = vmatpush1.bf16.msra.mxu0 %v1476
        %1997 = vmatprep.subr.bf16.mxu0 %v1481
        %1998 = vmatpush1.bf16.msra.mxu0 %v1480
        %1999 = vmatprep.subr.bf16.mxu0 %v1485
        %2000 = vmatpush1.bf16.msra.mxu0 %v1484
        %2001 = vmatprep.mubr.bf16.mxu0 %v430
        %2002 = vmatmul.mubr.bf16.gmra.mrb[0].mxu0 %v429
        %v2003 = vpop.f32.mrb[0].mxu0
        %v2004 = vadd.f32 %v1961, %v2003
        %v2005 = vpop.f32.mrb[0].mxu0
        %v2006 = vadd.f32 %v1963, %v2005
        %v2007 = vpop.f32.mrb[0].mxu0
        %v2008 = vadd.f32 %v1965, %v2007
        %v2009 = vpop.f32.mrb[0].mxu0
        %v2010 = vadd.f32 %v1967, %v2009
        %2011 = vdwg.mxu0
        %2012 = vmatprep.subr.bf16.mxu0 %v1489
        %2013 = vmatpush1.bf16.msra.mxu0 %v1488
        %2014 = vmatprep.subr.bf16.mxu0 %v1493
        %2015 = vmatpush1.bf16.msra.mxu0 %v1492
        %2016 = vmatprep.subr.bf16.mxu0 %v1497
        %2017 = vmatpush1.bf16.msra.mxu0 %v1496
        %2018 = vmatprep.subr.bf16.mxu0 %v1501
        %2019 = vmatpush1.bf16.msra.mxu0 %v1500
        %2020 = vmatprep.subr.bf16.mxu0 %v1505
        %2021 = vmatpush1.bf16.msra.mxu0 %v1504
        %2022 = vmatprep.subr.bf16.mxu0 %v1509
        %2023 = vmatpush1.bf16.msra.mxu0 %v1508
        %2024 = vmatprep.subr.bf16.mxu0 %v1513
        %2025 = vmatpush1.bf16.msra.mxu0 %v1512
        %2026 = vmatprep.subr.bf16.mxu0 %v1517
        %2027 = vmatpush1.bf16.msra.mxu0 %v1516
        %2028 = vmatprep.subr.bf16.mxu0 %v1521
        %2029 = vmatpush1.bf16.msra.mxu0 %v1520
        %2030 = vmatprep.subr.bf16.mxu0 %v1525
        %2031 = vmatpush1.bf16.msra.mxu0 %v1524
        %2032 = vmatprep.subr.bf16.mxu0 %v1529
        %2033 = vmatpush1.bf16.msra.mxu0 %v1528
        %2034 = vmatprep.subr.bf16.mxu0 %v1533
        %2035 = vmatpush1.bf16.msra.mxu0 %v1532
        %2036 = vmatprep.subr.bf16.mxu0 %v1537
        %2037 = vmatpush1.bf16.msra.mxu0 %v1536
        %2038 = vmatprep.subr.bf16.mxu0 %v1541
        %2039 = vmatpush1.bf16.msra.mxu0 %v1540
        %2040 = vmatprep.subr.bf16.mxu0 %v1545
        %2041 = vmatpush1.bf16.msra.mxu0 %v1544
        %2042 = vmatprep.subr.bf16.mxu0 %v1549
        %2043 = vmatpush1.bf16.msra.mxu0 %v1548
        %2044 = vmatprep.mubr.bf16.mxu0 %v432
        %2045 = vmatmul.mubr.bf16.gmra.mrb[0].mxu0 %v431
        %v2046 = vpop.f32.mrb[0].mxu0
        %v2047 = vadd.f32 %v2004, %v2046
        %v2048 = vpop.f32.mrb[0].mxu0
        %v2049 = vadd.f32 %v2006, %v2048
        %v2050 = vpop.f32.mrb[0].mxu0
        %v2051 = vadd.f32 %v2008, %v2050
        %v2052 = vpop.f32.mrb[0].mxu0
        %v2053 = vadd.f32 %v2010, %v2052
        %2054 = vdwg.mxu0
        %2055 = vmatprep.subr.bf16.mxu0 %v1553
        %2056 = vmatpush1.bf16.msra.mxu0 %v1552
        %2057 = vmatprep.subr.bf16.mxu0 0
        %2058 = vmatpush1.bf16.msra.mxu0 0
        %2059 = vmatprep.subr.bf16.mxu0 0
        %2060 = vmatpush1.bf16.msra.mxu0 0
        %2061 = vmatprep.subr.bf16.mxu0 0
        %2062 = vmatpush1.bf16.msra.mxu0 0
        %2063 = vmatprep.subr.bf16.mxu0 0
        %2064 = vmatpush1.bf16.msra.mxu0 0
        %2065 = vmatprep.subr.bf16.mxu0 0
        %2066 = vmatpush1.bf16.msra.mxu0 0
        %2067 = vmatprep.subr.bf16.mxu0 0
        %2068 = vmatpush1.bf16.msra.mxu0 0
        %2069 = vmatprep.subr.bf16.mxu0 0
        %2070 = vmatpush1.bf16.msra.mxu0 0
        %2071 = vmatprep.subr.bf16.mxu0 0
        %2072 = vmatpush1.bf16.msra.mxu0 0
        %2073 = vmatprep.subr.bf16.mxu0 0
        %2074 = vmatpush1.bf16.msra.mxu0 0
        %2075 = vmatprep.subr.bf16.mxu0 0
        %2076 = vmatpush1.bf16.msra.mxu0 0
        %2077 = vmatprep.subr.bf16.mxu0 0
        %2078 = vmatpush1.bf16.msra.mxu0 0
        %2079 = vmatprep.subr.bf16.mxu0 0
        %2080 = vmatpush1.bf16.msra.mxu0 0
        %2081 = vmatprep.subr.bf16.mxu0 0
        %2082 = vmatpush1.bf16.msra.mxu0 0
        %2083 = vmatprep.subr.bf16.mxu0 0
        %2084 = vmatpush1.bf16.msra.mxu0 0
        %2085 = vmatprep.subr.bf16.mxu0 0
        %2086 = vmatpush1.bf16.msra.mxu0 0
        %2087 = vmatprep.mubr.bf16.mxu0 0
        %2088 = vmatmul.mubr.bf16.gmra.mrb[0].mxu0 %v1752
        %v2089 = vpop.f32.mrb[0].mxu0
        %v2090 = vadd.f32 %v2047, %v2089
        %v2091 = vpop.f32.mrb[0].mxu0
        %v2092 = vadd.f32 %v2049, %v2091
        %v2093 = vpop.f32.mrb[0].mxu0
        %v2094 = vadd.f32 %v2051, %v2093
        %v2095 = vpop.f32.mrb[0].mxu0
        %v2096 = vadd.f32 %v2053, %v2095
        %2097 = vdwg.mxu0
        %v2098 = vmul.f32 %v1918, 0.2
        %v2099 = vmul.f32 %v1920, 0.2
        %v2100 = vmul.f32 %v2090, 0.2
        %v2101 = vmul.f32 %v2092, 0.2
        %v2102 = vmul.f32 %v1922, 0.2
        %v2103 = vmul.f32 %v1924, 0.2
        %v2104 = vmul.f32 %v2094, 0.2
        %v2105 = vmul.f32 %v2096, 0.2
        %v2106 = vmax.f32 %v1918, %v2098
        %v2107 = vmax.f32 %v1920, %v2099
        %v2108 = vmax.f32 %v2090, %v2100
        %v2109 = vmax.f32 %v2092, %v2101
        %v2110 = vmax.f32 %v1922, %v2102
        %v2111 = vmax.f32 %v1924, %v2103
        %v2112 = vmax.f32 %v2094, %v2104
        %v2113 = vmax.f32 %v2096, %v2105
        %v2114 = vpack.c.bf16 %v2110, %v2106
        %v2115 = vpack.c.bf16 %v2111, %v2107
        %v2116 = vpack.c.bf16 %v2112, %v2108
        %v2117 = vpack.c.bf16 %v2113, %v2109
        %v2118 = vld [vmem:[#allocation7] sm:$0xff]
        %v2119 = vld [vmem:[#allocation7 + $0x8] sm:$0xff]
        %v2120 = vld [vmem:[#allocation7 + $0x10] sm:$0xff]
        %v2121 = vld [vmem:[#allocation7 + $0x18] sm:$0xff]
        %v2122 = vld [vmem:[#allocation7 + $0x20] sm:$0xff]
        %v2123 = vld [vmem:[#allocation7 + $0x28] sm:$0xff]
        %v2124 = vld [vmem:[#allocation7 + $0x30] sm:$0xff]
        %v2125 = vld [vmem:[#allocation7 + $0x38] sm:$0xff]
        %v2126 = vld [vmem:[#allocation7 + $0x40] sm:$0xff]
        %v2127 = vld [vmem:[#allocation7 + $0x48] sm:$0xff]
        %v2128 = vld [vmem:[#allocation7 + $0x50] sm:$0xff]
        %v2129 = vld [vmem:[#allocation7 + $0x58] sm:$0xff]
        %v2130 = vld [vmem:[#allocation7 + $0x60] sm:$0xff]
        %v2131 = vld [vmem:[#allocation7 + $0x68] sm:$0xff]
        %v2132 = vld [vmem:[#allocation7 + $0x70] sm:$0xff]
        %v2133 = vld [vmem:[#allocation7 + $0x78] sm:$0xff]
        %v2134 = vld [vmem:[#allocation7 + $0x80] sm:$0xff]
        %v2135 = vld [vmem:[#allocation7 + $0x88] sm:$0xff]
        %v2136 = vld [vmem:[#allocation7 + $0x90] sm:$0xff]
        %v2137 = vld [vmem:[#allocation7 + $0x98] sm:$0xff]
        %v2138 = vld [vmem:[#allocation7 + $0xa0] sm:$0xff]
        %v2139 = vld [vmem:[#allocation7 + $0xa8] sm:$0xff]
        %v2140 = vld [vmem:[#allocation7 + $0xb0] sm:$0xff]
        %v2141 = vld [vmem:[#allocation7 + $0xb8] sm:$0xff]
        %v2142 = vld [vmem:[#allocation7 + $0xc0] sm:$0xff]
        %v2143 = vld [vmem:[#allocation7 + $0xc8] sm:$0xff]
        %v2144 = vld [vmem:[#allocation7 + $0xd0] sm:$0xff]
        %v2145 = vld [vmem:[#allocation7 + $0xd8] sm:$0xff]
        %v2146 = vld [vmem:[#allocation7 + $0xe0] sm:$0xff]
        %v2147 = vld [vmem:[#allocation7 + $0xe8] sm:$0xff]
        %v2148 = vld [vmem:[#allocation7 + $0xf0] sm:$0xff]
        %v2149 = vld [vmem:[#allocation7 + $0xf8] sm:$0xff]
        %v2150 = vld [vmem:[#allocation7 + $0x100] sm:$0xff]
        %v2151 = vld [vmem:[#allocation7 + $0x108] sm:$0xff]
        %v2152 = vld [vmem:[#allocation7 + $0x110] sm:$0xff]
        %v2153 = vld [vmem:[#allocation7 + $0x118] sm:$0xff]
        %v2154 = vld [vmem:[#allocation7 + $0x120] sm:$0xff]
        %v2155 = vld [vmem:[#allocation7 + $0x128] sm:$0xff]
        %v2156 = vld [vmem:[#allocation7 + $0x130] sm:$0xff]
        %v2157 = vld [vmem:[#allocation7 + $0x138] sm:$0xff]
        %v2158 = vld [vmem:[#allocation7 + $0x140] sm:$0xff]
        %v2159 = vld [vmem:[#allocation7 + $0x148] sm:$0xff]
        %v2160 = vld [vmem:[#allocation7 + $0x150] sm:$0xff]
        %v2161 = vld [vmem:[#allocation7 + $0x158] sm:$0xff]
        %v2162 = vld [vmem:[#allocation7 + $0x160] sm:$0xff]
        %v2163 = vld [vmem:[#allocation7 + $0x168] sm:$0xff]
        %v2164 = vld [vmem:[#allocation7 + $0x170] sm:$0xff]
        %v2165 = vld [vmem:[#allocation7 + $0x178] sm:$0xff]
        %v2166 = vld [vmem:[#allocation7 + $0x180] sm:$0xff]
        %v2167 = vld [vmem:[#allocation7 + $0x188] sm:$0xff]
        %v2168 = vld [vmem:[#allocation7 + $0x190] sm:$0xff]
        %v2169 = vld [vmem:[#allocation7 + $0x198] sm:$0xff]
        %v2170 = vld [vmem:[#allocation7 + $0x1a0] sm:$0xff]
        %v2171 = vld [vmem:[#allocation7 + $0x1a8] sm:$0xff]
        %v2172 = vld [vmem:[#allocation7 + $0x1b0] sm:$0xff]
        %v2173 = vld [vmem:[#allocation7 + $0x1b8] sm:$0xff]
        %v2174 = vld [vmem:[#allocation7 + $0x1c0] sm:$0xff]
        %v2175 = vld [vmem:[#allocation7 + $0x1c8] sm:$0xff]
        %v2176 = vld [vmem:[#allocation7 + $0x1d0] sm:$0xff]
        %v2177 = vld [vmem:[#allocation7 + $0x1d8] sm:$0xff]
        %v2178 = vld [vmem:[#allocation7 + $0x1e0] sm:$0xff]
        %v2179 = vld [vmem:[#allocation7 + $0x1e8] sm:$0xff]
        %v2180 = vld [vmem:[#allocation7 + $0x1f0] sm:$0xff]
        %v2181 = vld [vmem:[#allocation7 + $0x1f8] sm:$0xff]
        %v2182 = vld [vmem:[%s5] sm:$0x3]
        %v2184 = vlaneseq
        %v2185 = vshrl.u32 %v2184, 7
        %v2186 = vsub.s32 0, %v2185
        %v2187 = vrot.slane %v2182, %v2186
        %v2188 = vlaneseq
        %v2189 = vshrl.u32 %v2188, 7
        %v2190 = vsub.s32 1, %v2189
        %v2191 = vrot.slane %v2182, %v2190
        %v2258 = vunpack.c.l.b16 %v2118
        %v2259 = vunpack.c.h.b16 %v2118
        %v2260 = vunpack.c.l.b16 %v2119
        %v2261 = vunpack.c.h.b16 %v2119
        %v2262 = vunpack.c.l.b16 %v2120
        %v2263 = vunpack.c.h.b16 %v2120
        %v2264 = vunpack.c.l.b16 %v2121
        %v2265 = vunpack.c.h.b16 %v2121
        %v2266 = vunpack.c.l.b16 %v2122
        %v2267 = vunpack.c.h.b16 %v2122
        %v2268 = vunpack.c.l.b16 %v2123
        %v2269 = vunpack.c.h.b16 %v2123
        %v2270 = vunpack.c.l.b16 %v2124
        %v2271 = vunpack.c.h.b16 %v2124
        %v2272 = vunpack.c.l.b16 %v2125
        %v2273 = vunpack.c.h.b16 %v2125
        %v2274 = vunpack.c.l.b16 %v2126
        %v2275 = vunpack.c.h.b16 %v2126
        %v2276 = vunpack.c.l.b16 %v2127
        %v2277 = vunpack.c.h.b16 %v2127
        %v2278 = vunpack.c.l.b16 %v2128
        %v2279 = vunpack.c.h.b16 %v2128
        %v2280 = vunpack.c.l.b16 %v2129
        %v2281 = vunpack.c.h.b16 %v2129
        %v2282 = vunpack.c.l.b16 %v2130
        %v2283 = vunpack.c.h.b16 %v2130
        %v2284 = vunpack.c.l.b16 %v2131
        %v2285 = vunpack.c.h.b16 %v2131
        %v2286 = vunpack.c.l.b16 %v2132
        %v2287 = vunpack.c.h.b16 %v2132
        %v2288 = vunpack.c.l.b16 %v2133
        %v2289 = vunpack.c.h.b16 %v2133
        %v2290 = vunpack.c.l.b16 %v2134
        %v2291 = vunpack.c.h.b16 %v2134
        %v2292 = vunpack.c.l.b16 %v2135
        %v2293 = vunpack.c.h.b16 %v2135
        %v2294 = vunpack.c.l.b16 %v2136
        %v2295 = vunpack.c.h.b16 %v2136
        %v2296 = vunpack.c.l.b16 %v2137
        %v2297 = vunpack.c.h.b16 %v2137
        %v2298 = vunpack.c.l.b16 %v2138
        %v2299 = vunpack.c.h.b16 %v2138
        %v2300 = vunpack.c.l.b16 %v2139
        %v2301 = vunpack.c.h.b16 %v2139
        %v2302 = vunpack.c.l.b16 %v2140
        %v2303 = vunpack.c.h.b16 %v2140
        %v2304 = vunpack.c.l.b16 %v2141
        %v2305 = vunpack.c.h.b16 %v2141
        %v2306 = vunpack.c.l.b16 %v2142
        %v2307 = vunpack.c.h.b16 %v2142
        %v2308 = vunpack.c.l.b16 %v2143
        %v2309 = vunpack.c.h.b16 %v2143
        %v2310 = vunpack.c.l.b16 %v2144
        %v2311 = vunpack.c.h.b16 %v2144
        %v2312 = vunpack.c.l.b16 %v2145
        %v2313 = vunpack.c.h.b16 %v2145
        %v2314 = vunpack.c.l.b16 %v2146
        %v2315 = vunpack.c.h.b16 %v2146
        %v2316 = vunpack.c.l.b16 %v2147
        %v2317 = vunpack.c.h.b16 %v2147
        %v2318 = vunpack.c.l.b16 %v2148
        %v2319 = vunpack.c.h.b16 %v2148
        %v2320 = vunpack.c.l.b16 %v2149
        %v2321 = vunpack.c.h.b16 %v2149
        %v2322 = vunpack.c.l.b16 %v2150
        %v2323 = vunpack.c.h.b16 %v2150
        %v2324 = vunpack.c.l.b16 %v2151
        %v2325 = vunpack.c.h.b16 %v2151
        %v2326 = vunpack.c.l.b16 %v2152
        %v2327 = vunpack.c.h.b16 %v2152
        %v2328 = vunpack.c.l.b16 %v2153
        %v2329 = vunpack.c.h.b16 %v2153
        %v2330 = vunpack.c.l.b16 %v2154
        %v2331 = vunpack.c.h.b16 %v2154
        %v2332 = vunpack.c.l.b16 %v2155
        %v2333 = vunpack.c.h.b16 %v2155
        %v2334 = vunpack.c.l.b16 %v2156
        %v2335 = vunpack.c.h.b16 %v2156
        %v2336 = vunpack.c.l.b16 %v2157
        %v2337 = vunpack.c.h.b16 %v2157
        %v2338 = vunpack.c.l.b16 %v2158
        %v2339 = vunpack.c.h.b16 %v2158
        %v2340 = vunpack.c.l.b16 %v2159
        %v2341 = vunpack.c.h.b16 %v2159
        %v2342 = vunpack.c.l.b16 %v2160
        %v2343 = vunpack.c.h.b16 %v2160
        %v2344 = vunpack.c.l.b16 %v2161
        %v2345 = vunpack.c.h.b16 %v2161
        %v2346 = vunpack.c.l.b16 %v2162
        %v2347 = vunpack.c.h.b16 %v2162
        %v2348 = vunpack.c.l.b16 %v2163
        %v2349 = vunpack.c.h.b16 %v2163
        %v2350 = vunpack.c.l.b16 %v2164
        %v2351 = vunpack.c.h.b16 %v2164
        %v2352 = vunpack.c.l.b16 %v2165
        %v2353 = vunpack.c.h.b16 %v2165
        %v2354 = vunpack.c.l.b16 %v2166
        %v2355 = vunpack.c.h.b16 %v2166
        %v2356 = vunpack.c.l.b16 %v2167
        %v2357 = vunpack.c.h.b16 %v2167
        %v2358 = vunpack.c.l.b16 %v2168
        %v2359 = vunpack.c.h.b16 %v2168
        %v2360 = vunpack.c.l.b16 %v2169
        %v2361 = vunpack.c.h.b16 %v2169
        %v2362 = vunpack.c.l.b16 %v2170
        %v2363 = vunpack.c.h.b16 %v2170
        %v2364 = vunpack.c.l.b16 %v2171
        %v2365 = vunpack.c.h.b16 %v2171
        %v2366 = vunpack.c.l.b16 %v2172
        %v2367 = vunpack.c.h.b16 %v2172
        %v2368 = vunpack.c.l.b16 %v2173
        %v2369 = vunpack.c.h.b16 %v2173
        %v2370 = vunpack.c.l.b16 %v2174
        %v2371 = vunpack.c.h.b16 %v2174
        %v2372 = vunpack.c.l.b16 %v2175
        %v2373 = vunpack.c.h.b16 %v2175
        %v2374 = vunpack.c.l.b16 %v2176
        %v2375 = vunpack.c.h.b16 %v2176
        %v2376 = vunpack.c.l.b16 %v2177
        %v2377 = vunpack.c.h.b16 %v2177
        %v2378 = vunpack.c.l.b16 %v2178
        %v2379 = vunpack.c.h.b16 %v2178
        %v2380 = vunpack.c.l.b16 %v2179
        %v2381 = vunpack.c.h.b16 %v2179
        %v2382 = vunpack.c.l.b16 %v2180
        %v2383 = vunpack.c.h.b16 %v2180
        %v2384 = vunpack.c.l.b16 %v2181
        %v2385 = vunpack.c.h.b16 %v2181
        %v2386 = vpack.c.b16 %v2260, %v2258
        %v2387 = vpack.c.b16 %v2261, %v2259
        %v2388 = vpack.c.b16 %v2264, %v2262
        %v2389 = vpack.c.b16 %v2265, %v2263
        %v2390 = vpack.c.b16 %v2268, %v2266
        %v2391 = vpack.c.b16 %v2269, %v2267
        %v2392 = vpack.c.b16 %v2272, %v2270
        %v2393 = vpack.c.b16 %v2273, %v2271
        %v2394 = vpack.c.b16 %v2276, %v2274
        %v2395 = vpack.c.b16 %v2277, %v2275
        %v2396 = vpack.c.b16 %v2280, %v2278
        %v2397 = vpack.c.b16 %v2281, %v2279
        %v2398 = vpack.c.b16 %v2284, %v2282
        %v2399 = vpack.c.b16 %v2285, %v2283
        %v2400 = vpack.c.b16 %v2288, %v2286
        %v2401 = vpack.c.b16 %v2289, %v2287
        %v2402 = vpack.c.b16 %v2292, %v2290
        %v2403 = vpack.c.b16 %v2293, %v2291
        %v2404 = vpack.c.b16 %v2296, %v2294
        %v2405 = vpack.c.b16 %v2297, %v2295
        %v2406 = vpack.c.b16 %v2300, %v2298
        %v2407 = vpack.c.b16 %v2301, %v2299
        %v2408 = vpack.c.b16 %v2304, %v2302
        %v2409 = vpack.c.b16 %v2305, %v2303
        %v2410 = vpack.c.b16 %v2308, %v2306
        %v2411 = vpack.c.b16 %v2309, %v2307
        %v2412 = vpack.c.b16 %v2312, %v2310
        %v2413 = vpack.c.b16 %v2313, %v2311
        %v2414 = vpack.c.b16 %v2316, %v2314
        %v2415 = vpack.c.b16 %v2317, %v2315
        %v2416 = vpack.c.b16 %v2320, %v2318
        %v2417 = vpack.c.b16 %v2321, %v2319
        %v2418 = vpack.c.b16 %v2324, %v2322
        %v2419 = vpack.c.b16 %v2325, %v2323
        %v2420 = vpack.c.b16 %v2328, %v2326
        %v2421 = vpack.c.b16 %v2329, %v2327
        %v2422 = vpack.c.b16 %v2332, %v2330
        %v2423 = vpack.c.b16 %v2333, %v2331
        %v2424 = vpack.c.b16 %v2336, %v2334
        %v2425 = vpack.c.b16 %v2337, %v2335
        %v2426 = vpack.c.b16 %v2340, %v2338
        %v2427 = vpack.c.b16 %v2341, %v2339
        %v2428 = vpack.c.b16 %v2344, %v2342
        %v2429 = vpack.c.b16 %v2345, %v2343
        %v2430 = vpack.c.b16 %v2348, %v2346
        %v2431 = vpack.c.b16 %v2349, %v2347
        %v2432 = vpack.c.b16 %v2352, %v2350
        %v2433 = vpack.c.b16 %v2353, %v2351
        %v2434 = vpack.c.b16 %v2356, %v2354
        %v2435 = vpack.c.b16 %v2357, %v2355
        %v2436 = vpack.c.b16 %v2360, %v2358
        %v2437 = vpack.c.b16 %v2361, %v2359
        %v2438 = vpack.c.b16 %v2364, %v2362
        %v2439 = vpack.c.b16 %v2365, %v2363
        %v2440 = vpack.c.b16 %v2368, %v2366
        %v2441 = vpack.c.b16 %v2369, %v2367
        %v2442 = vpack.c.b16 %v2372, %v2370
        %v2443 = vpack.c.b16 %v2373, %v2371
        %v2444 = vpack.c.b16 %v2376, %v2374
        %v2445 = vpack.c.b16 %v2377, %v2375
        %v2446 = vpack.c.b16 %v2380, %v2378
        %v2447 = vpack.c.b16 %v2381, %v2379
        %v2448 = vpack.c.b16 %v2384, %v2382
        %v2449 = vpack.c.b16 %v2385, %v2383
        %2514 = vmatprep.subr.bf16.mxu0 %v2387
        %2515 = vmatpush1.bf16.msra.mxu0 %v2386
        %2516 = vmatprep.subr.bf16.mxu0 %v2389
        %2517 = vmatpush1.bf16.msra.mxu0 %v2388
        %2518 = vmatprep.subr.bf16.mxu0 %v2391
        %2519 = vmatpush1.bf16.msra.mxu0 %v2390
        %2520 = vmatprep.subr.bf16.mxu0 %v2393
        %2521 = vmatpush1.bf16.msra.mxu0 %v2392
        %2522 = vmatprep.subr.bf16.mxu0 %v2395
        %2523 = vmatpush1.bf16.msra.mxu0 %v2394
        %2524 = vmatprep.subr.bf16.mxu0 %v2397
        %2525 = vmatpush1.bf16.msra.mxu0 %v2396
        %2526 = vmatprep.subr.bf16.mxu0 %v2399
        %2527 = vmatpush1.bf16.msra.mxu0 %v2398
        %2528 = vmatprep.subr.bf16.mxu0 %v2401
        %2529 = vmatpush1.bf16.msra.mxu0 %v2400
        %2530 = vmatprep.subr.bf16.mxu0 %v2403
        %2531 = vmatpush1.bf16.msra.mxu0 %v2402
        %2532 = vmatprep.subr.bf16.mxu0 %v2405
        %2533 = vmatpush1.bf16.msra.mxu0 %v2404
        %2534 = vmatprep.subr.bf16.mxu0 %v2407
        %2535 = vmatpush1.bf16.msra.mxu0 %v2406
        %2536 = vmatprep.subr.bf16.mxu0 %v2409
        %2537 = vmatpush1.bf16.msra.mxu0 %v2408
        %2538 = vmatprep.subr.bf16.mxu0 %v2411
        %2539 = vmatpush1.bf16.msra.mxu0 %v2410
        %2540 = vmatprep.subr.bf16.mxu0 %v2413
        %2541 = vmatpush1.bf16.msra.mxu0 %v2412
        %2542 = vmatprep.subr.bf16.mxu0 %v2415
        %2543 = vmatpush1.bf16.msra.mxu0 %v2414
        %2544 = vmatprep.subr.bf16.mxu0 %v2417
        %2545 = vmatpush1.bf16.msra.mxu0 %v2416
        %2546 = vmatprep.mubr.bf16.mxu0 %v2115
        %2547 = vmatmul.mubr.bf16.gmra.mrb[0].mxu0 %v2114
        %v2548 = vpop.f32.mrb[0].mxu0
        %v2549 = vadd.f32 %v2187, %v2548
        %v2550 = vpop.f32.mrb[0].mxu0
        %v2551 = vadd.f32 %v2191, %v2550
        %v2552 = vpop.f32.mrb[0].mxu0
        %v2553 = vadd.f32 %v2187, %v2552
        %v2554 = vpop.f32.mrb[0].mxu0
        %v2555 = vadd.f32 %v2191, %v2554
        %2556 = vdwg.mxu0
        %2557 = vmatprep.subr.bf16.mxu0 %v2419
        %2558 = vmatpush1.bf16.msra.mxu0 %v2418
        %2559 = vmatprep.subr.bf16.mxu0 %v2421
        %2560 = vmatpush1.bf16.msra.mxu0 %v2420
        %2561 = vmatprep.subr.bf16.mxu0 %v2423
        %2562 = vmatpush1.bf16.msra.mxu0 %v2422
        %2563 = vmatprep.subr.bf16.mxu0 %v2425
        %2564 = vmatpush1.bf16.msra.mxu0 %v2424
        %2565 = vmatprep.subr.bf16.mxu0 %v2427
        %2566 = vmatpush1.bf16.msra.mxu0 %v2426
        %2567 = vmatprep.subr.bf16.mxu0 %v2429
        %2568 = vmatpush1.bf16.msra.mxu0 %v2428
        %2569 = vmatprep.subr.bf16.mxu0 %v2431
        %2570 = vmatpush1.bf16.msra.mxu0 %v2430
        %2571 = vmatprep.subr.bf16.mxu0 %v2433
        %2572 = vmatpush1.bf16.msra.mxu0 %v2432
        %2573 = vmatprep.subr.bf16.mxu0 %v2435
        %2574 = vmatpush1.bf16.msra.mxu0 %v2434
        %2575 = vmatprep.subr.bf16.mxu0 %v2437
        %2576 = vmatpush1.bf16.msra.mxu0 %v2436
        %2577 = vmatprep.subr.bf16.mxu0 %v2439
        %2578 = vmatpush1.bf16.msra.mxu0 %v2438
        %2579 = vmatprep.subr.bf16.mxu0 %v2441
        %2580 = vmatpush1.bf16.msra.mxu0 %v2440
        %2581 = vmatprep.subr.bf16.mxu0 %v2443
        %2582 = vmatpush1.bf16.msra.mxu0 %v2442
        %2583 = vmatprep.subr.bf16.mxu0 %v2445
        %2584 = vmatpush1.bf16.msra.mxu0 %v2444
        %2585 = vmatprep.subr.bf16.mxu0 %v2447
        %2586 = vmatpush1.bf16.msra.mxu0 %v2446
        %2587 = vmatprep.subr.bf16.mxu0 %v2449
        %2588 = vmatpush1.bf16.msra.mxu0 %v2448
        %2589 = vmatprep.mubr.bf16.mxu0 %v2117
        %2590 = vmatmul.mubr.bf16.gmra.mrb[0].mxu0 %v2116
        %v2591 = vpop.f32.mrb[0].mxu0
        %v2592 = vadd.f32 %v2549, %v2591
        %v2593 = vpop.f32.mrb[0].mxu0
        %v2594 = vadd.f32 %v2551, %v2593
        %v2595 = vpop.f32.mrb[0].mxu0
        %v2596 = vadd.f32 %v2553, %v2595
        %v2597 = vpop.f32.mrb[0].mxu0
        %v2598 = vadd.f32 %v2555, %v2597
        %2599 = vdwg.mxu0
        %v2600 = vmul.f32 %v2592, 0.2
        %v2601 = vmul.f32 %v2594, 0.2
        %v2602 = vmul.f32 %v2596, 0.2
        %v2603 = vmul.f32 %v2598, 0.2
        %v2604 = vmax.f32 %v2592, %v2600
        %v2605 = vmax.f32 %v2594, %v2601
        %v2606 = vmax.f32 %v2596, %v2602
        %v2607 = vmax.f32 %v2598, %v2603
        %v2608 = vld [vmem:[%s6] sm:$0x3]
        %v2610 = vlaneseq
        %v2611 = vshrl.u32 %v2610, 7
        %v2612 = vsub.s32 0, %v2611
        %v2613 = vrot.slane %v2608, %v2612
        %v2614 = vlaneseq
        %v2615 = vshrl.u32 %v2614, 7
        %v2616 = vsub.s32 1, %v2615
        %v2617 = vrot.slane %v2608, %v2616
        %v2620 = vmul.f32 %v2604, %v2613
        %v2621 = vmul.f32 %v2605, %v2617
        %v2622 = vmul.f32 %v2606, %v2613
        %v2623 = vmul.f32 %v2607, %v2617
        %v2624 = vadd.f32 %v2620, %v2621
        %2625 = vadd.xlane.f32.xlu0 %v2624
        %v2626 = vpop.xlane.xlu0 %2625
        %v2627 = vadd.f32 %v2622, %v2623
        %2628 = vadd.xlane.f32.xlu0 %v2627
        %v2629 = vpop.xlane.xlu0 %2628
        %v2630 = vld [vmem:[#allocation2] sm:$0x1]
        %v2632 = vlaneseq
        %v2633 = vshrl.u32 %v2632, 7
        %v2634 = vsub.s32 0, %v2633
        %v2635 = vrot.slane %v2630, %v2634
        %v2637 = vadd.f32 %v2626, %v2635
        %v2638 = vadd.f32 %v2629, %v2635
        %v2639 = vxor.u32 %v2637, 2147483648
        %v2640 = vxor.u32 %v2638, 2147483648
        %v2641 = vmul.f32 %v2639, 1.442695
        %v2642 = vpow.pop %v2641
        %v2643 = vmul.f32 %v2640, 1.442695
        %v2644 = vpow.pop %v2643
        %v2645 = vadd.f32 %v2642, 1.0
        %v2646 = vadd.f32 %v2644, 1.0
        %v2647 = vrcp.pop %v2645
        %v2648 = vmul.f32 1.0, %v2647
        %v2649 = vrcp.pop %v2646
        %v2650 = vmul.f32 1.0, %v2649
        %vm2651 = vcmask 7168
        %2652 = vst.msk [vmem:[%s386] sm:$0xff] %vm2651, %v2648
        %2653 = vst.msk [vmem:[%s386 + $0x8] sm:$0xff] %vm2651, %v2650
        %s2654 = sand.u32 %s211, 1
        %s2655 = sand.u32 %s211, 1
        %s2656 = smul.addr %s2655, 16
        %s2657 = scalar_lea.vmem [#allocation8], %s2656
        // Predicated region
        $region65: #{tpu_custom_call.1} parent=51 // pred_check
          %p2658 = pneg %p221
        $region66: #{tpu_custom_call.1} parent=51 // pred_check_branch
          %2660 = sbr.rel (%p2658) target = $region68
        $region67: #{tpu_custom_call.1} parent=51 // pred_region
          %s2661 = smul.u32 2, %s25
          %s2662 = ssub.s32 3, %s2661
          %p2663 = scmp.lt.s32.totalorder %s2662, 2
          %s2664 = scalar_select %p2663, %s2662, 2
          %s2665 = smul.u32 128, %s2664
          %p2666 = scmp.ne.s32.totalorder 0, %s2665
          %s2667 = smul.addr %s2661, 8
          %s2668 = scalar_lea.vmem %s8, %s2667
          // Predicated region
          $region69: #{tpu_custom_call.1} parent=67 // pred_check
            %p2669 = pneg %p2666
          $region70: #{tpu_custom_call.1} parent=67 // pred_check_branch
            %2671 = sbr.rel (%p2669) target = $region72
          $region71: #{tpu_custom_call.1} parent=67 // pred_region
            // Predicated region
            $region73: #{tpu_custom_call.1} parent=71 // pred_check
              _
            $region74: #{tpu_custom_call.1} parent=71 // pred_check_branch
              %2673 = sbr.rel (0) target = $region76
            $region75: #{tpu_custom_call.1} parent=71 // pred_region
              // Predicated region
              $region95: #{tpu_custom_call.1} parent=75 // pred_check
                _
              $region96: #{tpu_custom_call.1} parent=75 // pred_check_branch
                %2724 = sbr.rel (0) target = $region98
              $region97: #{tpu_custom_call.1} parent=75 // pred_region
                %s2725 = sshrl.u32 %s2664, 1
                // While loop
                $region99: #{tpu_custom_call.1} parent=97 // loop_pre_header
                  _
                $region100: #{tpu_custom_call.1} parent=97 // loop_header
                  %s2727 = sphi 0, %s2729
                  %p2728 = scmp.ge.s32.totalorder %s2727, %s2725
                  %s2732 = sphi 0, %s2741
                  %s2733 = sphi %s2657, %s2744
                  %s2734 = sphi %s2668, %s2745
                $region101: #{tpu_custom_call.1} parent=97 // loop_header_branch
                  %2731 = sbr.rel (%p2728) target = $region105
                $region102: #{tpu_custom_call.1} parent=97 // loop_body
                  %v2735 = vld [vmem:[%s2733] sm:$0xff]
                  %2736 = vst [vmem:[%s2734] sm:$0xff] %v2735
                  %v2737 = vld [vmem:[%s2733 + $0x8] sm:$0xff]
                  %2738 = vst [vmem:[%s2734 + $0x8] sm:$0xff] %v2737
                  %s2739 = sadd.s32 1, %s2732
                  %p2740 = scmp.ge.s32.totalorder %s2739, %s2725
                  %s2741 = scalar_select %p2740, 0, %s2739
                  %s2742 = smul.u32 %s2741, 16
                  %s2743 = smul.u32 %s2741, 16
                  %s2744 = scalar_lea.vmem %s2657, %s2742 [#allocation8]
                  %s2745 = scalar_lea.vmem %s2668, %s2743
                $region103: #{tpu_custom_call.1} parent=97 // loop_footer
                  %s2729 = sadd.s32 %s2727, 1
                $region104: #{tpu_custom_call.1} parent=97 // loop_footer_branch
                  %2726 = sbr.rel target = $region100
                $region105: #{tpu_custom_call.1} parent=97 // loop_exit
                  _
                %s2746 = sshrl.u32 %s2664, 1
                %s2747 = sand.u32 %s2664, 1
                %s2748 = smul.u32 %s2746, 2
                %s2749 = smul.u32 8, %s2748
                %s2750 = scalar_lea.vmem %s2657, %s2749 [#allocation8]
                %s2751 = smul.u32 8, %s2748
                %s2752 = scalar_lea.vmem %s2668, %s2751
                // While loop
                $region106: #{tpu_custom_call.1} parent=97 // loop_pre_header
                  _
                $region107: #{tpu_custom_call.1} parent=97 // loop_header
                  %s2754 = sphi 0, %s2756
                  %p2755 = scmp.ge.s32.totalorder %s2754, %s2747
                  %s2759 = sphi 0, %s2766
                  %s2760 = sphi %s2750, %s2769
                  %s2761 = sphi %s2752, %s2770
                $region108: #{tpu_custom_call.1} parent=97 // loop_header_branch
                  %2758 = sbr.rel (%p2755) target = $region112
                $region109: #{tpu_custom_call.1} parent=97 // loop_body
                  %v2762 = vld [vmem:[%s2760] sm:$0xff]
                  %2763 = vst [vmem:[%s2761] sm:$0xff] %v2762
                  %s2764 = sadd.s32 1, %s2759
                  %p2765 = scmp.ge.s32.totalorder %s2764, %s2747
                  %s2766 = scalar_select %p2765, 0, %s2764
                  %s2767 = smul.u32 %s2766, 8
                  %s2768 = smul.u32 %s2766, 8
                  %s2769 = scalar_lea.vmem %s2750, %s2767 [#allocation8]
                  %s2770 = scalar_lea.vmem %s2752, %s2768
                $region110: #{tpu_custom_call.1} parent=97 // loop_footer
                  %s2756 = sadd.s32 %s2754, 1
                $region111: #{tpu_custom_call.1} parent=97 // loop_footer_branch
                  %2753 = sbr.rel target = $region107
                $region112: #{tpu_custom_call.1} parent=97 // loop_exit
                  _
              $region98: #{tpu_custom_call.1} parent=75 // pred_fallthru
                _
              // Predicated region
              $region113: #{tpu_custom_call.1} parent=75 // pred_check
                _
              $region114: #{tpu_custom_call.1} parent=75 // pred_check_branch
                %2772 = sbr.rel target = $region116
              $region115: #{tpu_custom_call.1} parent=75 // pred_region
                _
              $region116: #{tpu_custom_call.1} parent=75 // pred_fallthru
                _
            $region76: #{tpu_custom_call.1} parent=71 // pred_fallthru
              _
            // Predicated region
            $region77: #{tpu_custom_call.1} parent=71 // pred_check
              _
            $region78: #{tpu_custom_call.1} parent=71 // pred_check_branch
              %2675 = sbr.rel target = $region80
            $region79: #{tpu_custom_call.1} parent=71 // pred_region
              %s2677 = sshrl.u32 %s2664, 1
              // While loop
              $region81: #{tpu_custom_call.1} parent=79 // loop_pre_header
                _
              $region82: #{tpu_custom_call.1} parent=79 // loop_header
                %s2679 = sphi 0, %s2681
                %p2680 = scmp.ge.s32.totalorder %s2679, %s2677
                %s2684 = sphi 0, %s2693
                %s2685 = sphi %s2657, %s2696
                %s2686 = sphi %s2668, %s2697
              $region83: #{tpu_custom_call.1} parent=79 // loop_header_branch
                %2683 = sbr.rel (%p2680) target = $region87
              $region84: #{tpu_custom_call.1} parent=79 // loop_body
                %v2687 = vld [vmem:[%s2685] sm:$0xff]
                %2688 = vst [vmem:[%s2686] sm:$0xff] %v2687
                %v2689 = vld [vmem:[%s2685 + $0x8] sm:$0xff]
                %2690 = vst [vmem:[%s2686 + $0x8] sm:$0xff] %v2689
                %s2691 = sadd.s32 1, %s2684
                %p2692 = scmp.ge.s32.totalorder %s2691, %s2677
                %s2693 = scalar_select %p2692, 0, %s2691
                %s2694 = smul.u32 %s2693, 16
                %s2695 = smul.u32 %s2693, 16
                %s2696 = scalar_lea.vmem %s2657, %s2694 [#allocation8]
                %s2697 = scalar_lea.vmem %s2668, %s2695
              $region85: #{tpu_custom_call.1} parent=79 // loop_footer
                %s2681 = sadd.s32 %s2679, 1
              $region86: #{tpu_custom_call.1} parent=79 // loop_footer_branch
                %2678 = sbr.rel target = $region82
              $region87: #{tpu_custom_call.1} parent=79 // loop_exit
                _
              %s2698 = sshrl.u32 %s2664, 1
              %s2699 = sand.u32 %s2664, 1
              %s2700 = smul.u32 %s2698, 2
              %s2701 = smul.u32 8, %s2700
              %s2702 = scalar_lea.vmem %s2657, %s2701 [#allocation8]
              %s2703 = smul.u32 8, %s2700
              %s2704 = scalar_lea.vmem %s2668, %s2703
              // While loop
              $region88: #{tpu_custom_call.1} parent=79 // loop_pre_header
                _
              $region89: #{tpu_custom_call.1} parent=79 // loop_header
                %s2706 = sphi 0, %s2708
                %p2707 = scmp.ge.s32.totalorder %s2706, %s2699
                %s2711 = sphi 0, %s2718
                %s2712 = sphi %s2702, %s2721
                %s2713 = sphi %s2704, %s2722
              $region90: #{tpu_custom_call.1} parent=79 // loop_header_branch
                %2710 = sbr.rel (%p2707) target = $region94
              $region91: #{tpu_custom_call.1} parent=79 // loop_body
                %v2714 = vld [vmem:[%s2712] sm:$0xff]
                %2715 = vst [vmem:[%s2713] sm:$0xff] %v2714
                %s2716 = sadd.s32 1, %s2711
                %p2717 = scmp.ge.s32.totalorder %s2716, %s2699
                %s2718 = scalar_select %p2717, 0, %s2716
                %s2719 = smul.u32 %s2718, 8
                %s2720 = smul.u32 %s2718, 8
                %s2721 = scalar_lea.vmem %s2702, %s2719 [#allocation8]
                %s2722 = scalar_lea.vmem %s2704, %s2720
              $region92: #{tpu_custom_call.1} parent=79 // loop_footer
                %s2708 = sadd.s32 %s2706, 1
              $region93: #{tpu_custom_call.1} parent=79 // loop_footer_branch
                %2705 = sbr.rel target = $region89
              $region94: #{tpu_custom_call.1} parent=79 // loop_exit
                _
            $region80: #{tpu_custom_call.1} parent=71 // pred_fallthru
              _
          $region72: #{tpu_custom_call.1} parent=67 // pred_fallthru
            _
          %2773 = vnop
        $region68: #{tpu_custom_call.1} parent=51 // pred_fallthru
          _
      $region52: #{tpu_custom_call.1} parent=5 // pred_fallthru
        _
      %p2774 = scmp.le.s32.totalorder 2, %s20
      // Predicated region
      $region117: #{tpu_custom_call.1} parent=5 // pred_check
        %p2775 = pneg %p2774
      $region118: #{tpu_custom_call.1} parent=5 // pred_check_branch
        %2777 = sbr.rel (%p2775) target = $region120
      $region119: #{tpu_custom_call.1} parent=5 // pred_region
        %s2778 = ssub.s32 %s20, 2
        // Predicated region
        $region121: #{tpu_custom_call.1} parent=119 // pred_check
          %p2779 = pneg %p227
        $region122: #{tpu_custom_call.1} parent=119 // pred_check_branch
          %2781 = sbr.rel (%p2779) target = $region124
        $region123: #{tpu_custom_call.1} parent=119 // pred_region
          %s2782 = sand.u32 %s212, 1
          %s2783 = sand.u32 %s212, 1
          %s2784 = smul.addr %s2783, 16
          %s2785 = scalar_lea.vmem [#allocation8], %s2784
        $region124: #{tpu_custom_call.1} parent=119 // pred_fallthru
          _
      $region120: #{tpu_custom_call.1} parent=5 // pred_fallthru
        _
    $region6: #{tpu_custom_call.1} parent=1 // loop_footer
      %s24 = sadd.s32 1, %s20
    $region7: #{tpu_custom_call.1} parent=1 // loop_footer_branch
      %19 = sbr.rel target = $region3
    $region8: #{tpu_custom_call.1} parent=1 // loop_exit
      _
    %2786 = vsyncpa [#allocation4], 1
    %s2787 = scalar_lea.sflag [#allocation4], 1
    %2788 = vsyncpa %s2787, 1
    %2789 = vsyncpa [#allocation6], 1

</llo_original>
